<compile_context>
chip_gen: v7x
topology: tpu7x:2x2x1
jax: 0.10.0
libtpu: 0.0.40
codegen_flags: <defaults>
</compile_context>

<pallas_src>
import functools

import jax
import jax.numpy as jnp
from jax.experimental import pallas as pl
from jax.experimental.pallas import tpu as pltpu

LANE_PAD = 128   # padded width for hidden / feature dims (MXU-native)
OUT_PAD = 8      # padded lane width of the kernel output (n_out=3 -> 8)


def _round_up(v, m):
    return ((v + m - 1) // m) * m


def _default_act_dtype():
    """bf16 elementwise (bias-add / tanh) only on chips with a bf16 VPU/EUP (v6e/v7x)."""
    try:
        kind = jax.devices()[0].device_kind.lower()
    except Exception:
        return jnp.float32
    if any(tag in kind for tag in ("v6", "v7", "7x")):
        return jnp.bfloat16
    return jnp.float32   # v5e & older: no bf16 VPU/EUP -> keep f32 elementwise


def _mlp_kernel(x_ref, w_ref, b_ref, out_ref, *, linear_layers, act_dtype):
    """x_ref: (TB, n_input) f32. w_ref: (L,128,128) bf16. b_ref: (L,1,128) act_dtype.
    out_ref: (TB, OUT_PAD) f32. `linear_layers` = layer indices with NO tanh after them."""
    n_layers = w_ref.shape[0]
    n_input = x_ref.shape[1]
    n_out_pad = out_ref.shape[1]

    h = x_ref[...].astype(jnp.bfloat16)

    # ---- hidden chain: layer 0 contracts only over the real n_input rows of padded W0;
    #      later layers use the full 128x128 tile (padded rows/cols are exactly zero). ----
    for k in range(n_layers - 1):
        w = w_ref[0, :n_input, :] if k == 0 else w_ref[k]
        y = jnp.dot(h, w, preferred_element_type=act_dtype) + b_ref[k]
        if k not in linear_layers:
            y = jnp.tanh(y)
        h = y.astype(jnp.bfloat16)          # no-op cast when act_dtype == bf16

    # ---- final layer (128 -> 3, zero-padded cols): f32 accumulate/elementwise, then
    #      store only the first OUT_PAD lanes (narrow, lane-dense writeback). ----
    y = (jnp.dot(h, w_ref[n_layers - 1], preferred_element_type=jnp.float32)
         + b_ref[n_layers - 1].astype(jnp.float32))
    if (n_layers - 1) not in linear_layers:
        y = jnp.tanh(y)
    out_ref[...] = y[:, :n_out_pad].astype(out_ref.dtype)


def pack_params(params, act_dtype, pad=LANE_PAD):
    """Zero-pad every (W, b) to (pad, pad)/(1, pad) and stack.
    Weights -> bf16 (MXU-native); biases -> act_dtype (bf16 on v6e/v7x, f32 on v5e)."""
    n_layers = len(params)
    w_packed = jnp.zeros((n_layers, pad, pad), jnp.float32)
    b_packed = jnp.zeros((n_layers, 1, pad), jnp.float32)
    for i, (w, b) in enumerate(params):
        fan_in, fan_out = w.shape
        assert fan_in <= pad and fan_out <= pad, (
            f"layer {i}: ({fan_in},{fan_out}) exceeds the {pad}-lane padding")
        w_packed = w_packed.at[i, :fan_in, :fan_out].set(w)
        b_packed = b_packed.at[i, 0, :fan_out].set(b)
    return w_packed.astype(jnp.bfloat16), b_packed.astype(act_dtype)


def _choose_tile(batch, block_batch):
    """Largest tile <= block_batch that still yields >= 2 grid steps (v7x megacore) when
    the batch allows it; always a multiple of 8 sublanes (or the full tiny batch)."""
    if batch <= 8:
        return batch                      # block dim == full array dim is legal
    half = _round_up(pl.cdiv(batch, 2), 8)
    return max(8, min(block_batch, half))


def vanilla_model_forward(x, params, *, block_batch=2048, act_dtype=None):
    """x: (B, n_input) float32. params: list of (W, b), W shaped (in, out)."""
    B, n_input = x.shape
    n_out = params[-1][0].shape[1]
    n_out_pad = max(OUT_PAD, _round_up(n_out, 8))
    n_layers = len(params)
    n_feat_layers = n_layers // 2                    # 3 for the default config
    # no activation after the feature-output layer and after the final layer
    linear_layers = frozenset({n_feat_layers - 1, n_layers - 1})

    if act_dtype is None:
        act_dtype = _default_act_dtype()
    w_packed, b_packed = pack_params(params, act_dtype)

    tb = _choose_tile(B, block_batch)
    num_steps = pl.cdiv(B, tb)   # ragged tail handled by Pallas boundary masking (no jnp.pad)

    kernel = functools.partial(_mlp_kernel, linear_layers=linear_layers,
                               act_dtype=act_dtype)

    # Advisory cost hint for XLA scheduling around the custom call.
    flops = 2 * B * sum(int(w.shape[0]) * int(w.shape[1]) for w, _ in params)
    transcendentals = B * sum(int(w.shape[1]) for i, (w, _) in enumerate(params)
                              if i not in linear_layers)
    bytes_accessed = (x.size * x.dtype.itemsize
                      + w_packed.size * 2
                      + b_packed.size * b_packed.dtype.itemsize
                      + B * n_out_pad * 4)

    out = pl.pallas_call(
        kernel,
        out_shape=jax.ShapeDtypeStruct((B, n_out_pad), jnp.float32),
        grid=(num_steps,),
        in_specs=[
            # x: tiled along the batch
            pl.BlockSpec((tb, n_input), lambda i: (i, 0)),
            # packed weights / biases: constant index map -> stay VMEM-resident
            pl.BlockSpec(w_packed.shape, lambda i: (0, 0, 0)),
            pl.BlockSpec(b_packed.shape, lambda i: (0, 0, 0)),
        ],
        out_specs=pl.BlockSpec((tb, n_out_pad), lambda i: (i, 0)),
        compiler_params=pltpu.CompilerParams(
            dimension_semantics=("parallel",),   # v7x: shard batch steps over both TCs
        ),
        cost_estimate=pl.CostEstimate(flops=flops,
                                      transcendentals=transcendentals,
                                      bytes_accessed=bytes_accessed),
    )(x, w_packed, b_packed)

    # Strip the lane padding of the 3-wide output.
    return out[:, :n_out]


def init_params(key, n_input, feature_dim=20, feat_hidden=(64, 64),
                output_hidden=(64, 64), n_output=3):
    """Deterministic init matching torch.nn.Linear's U(-1/sqrt(fan_in), 1/sqrt(fan_in))."""
    dims = ([n_input] + list(feat_hidden) + [feature_dim]
            + list(output_hidden) + [n_output])
    layer_dims = [(dims[i], dims[i + 1]) for i in range(len(dims) - 1)]
    params = []
    for (fan_in, fan_out) in layer_dims:
        key, kw, kb = jax.random.split(key, 3)
        bound = 1.0 / jnp.sqrt(fan_in)
        w = jax.random.uniform(kw, (fan_in, fan_out), jnp.float32, -bound, bound)
        b = jax.random.uniform(kb, (fan_out,), jnp.float32, -bound, bound)
        params.append((w, b))
    return params


def reference_forward(x, params):
    """Pure-JAX f32 reference with PyTorch semantics."""
    h = x
    n_layers = len(params)
    linear_layers = {n_layers // 2 - 1, n_layers - 1}   # {2, 5}
    for i, (w, b) in enumerate(params):
        h = h @ w + b
        if i not in linear_layers:
            h = jnp.tanh(h)
    return h


if __name__ == "__main__":
    key = jax.random.PRNGKey(0)
    n_input = 32
    batch = 260  # not a multiple of 8 or of the tile -> exercises the ragged-tail grid

    kx, kp = jax.random.split(key)
    x = jax.random.normal(kx, (batch, n_input), jnp.float32)
    params = init_params(kp, n_input)

    out = jax.block_until_ready(vanilla_model_forward(x, params))
    ref = reference_forward(x, params)

    assert out.shape == (batch, 3), out.shape
    # bf16 MXU operands (and bf16 bias/tanh on v6e/v7x) with f32 final-layer accumulation
    # -> ~1% relative error vs the f32 reference
    assert jnp.allclose(out, ref, atol=3e-2, rtol=3e-2), (
        "mismatch vs JAX reference; max abs err = "
        f"{float(jnp.max(jnp.abs(out - ref)))}")

    print("KERNEL_OK")
</pallas_src>

<mosaic_0001>
module attributes {stable_mosaic.version = 11 : i64} {
  func.func @_mlp_kernel(%arg0: i32, %arg1: memref<136x32xf32, #tpu.memory_space<vmem>>, %arg2: memref<6x128x128xbf16, #tpu.memory_space<vmem>>, %arg3: memref<6x1x128xf32, #tpu.memory_space<vmem>>, %arg4: memref<136x8xf32, #tpu.memory_space<vmem>>) attributes {dimension_semantics = [#tpu.dimension_semantics<parallel>], iteration_bounds = array<i64: 2>, scalar_prefetch = 0 : i64, scratch_operands = 0 : i64, tpu.core_type = #tpu.core_type<tc>, window_params = [{transform_indices = @transform_0, window_bounds = array<i64: 136, 32>}, {pipeline_mode = #tpu.pipeline_mode<synchronous>, transform_indices = @transform_1, window_bounds = array<i64: 6, 128, 128>}, {pipeline_mode = #tpu.pipeline_mode<synchronous>, transform_indices = @transform_2, window_bounds = array<i64: 6, 1, 128>}, {transform_indices = @transform_3, window_bounds = array<i64: 136, 8>}]} {
    %c0 = arith.constant 0 : index
    %c0_0 = arith.constant 0 : index
    %0 = vector.load %arg1[%c0, %c0_0] : memref<136x32xf32, #tpu.memory_space<vmem>>, vector<136x32xf32>
    %1 = arith.truncf %0 : vector<136x32xf32> to vector<136x32xbf16>
    %c0_1 = arith.constant 0 : index
    %c0_2 = arith.constant 0 : index
    %c0_3 = arith.constant 0 : index
    %2 = vector.load %arg2[%c0_1, %c0_2, %c0_3] : memref<6x128x128xbf16, #tpu.memory_space<vmem>>, vector<1x32x128xbf16>
    %3 = vector.shape_cast %2 : vector<1x32x128xbf16> to vector<32x128xbf16>
    %cst = arith.constant dense<0.000000e+00> : vector<136x128xf32>
    %4 = tpu.matmul %1, %3, %cst {dimension_numbers = #tpu.dot_dimension_numbers<[1], [0], [0], [1], [0, 0, 1, 1], [], []>} : vector<136x32xbf16>, vector<32x128xbf16>, vector<136x128xf32> -> vector<136x128xf32>
    %c0_4 = arith.constant 0 : index
    %c0_5 = arith.constant 0 : index
    %c0_6 = arith.constant 0 : index
    %5 = vector.load %arg3[%c0_4, %c0_5, %c0_6] : memref<6x1x128xf32, #tpu.memory_space<vmem>>, vector<1x1x128xf32>
    %6 = vector.shape_cast %5 : vector<1x1x128xf32> to vector<1x128xf32>
    %7 = vector.broadcast %6 : vector<1x128xf32> to vector<136x128xf32>
    %8 = arith.addf %4, %7 : vector<136x128xf32>
    %9 = math.tanh %8 : vector<136x128xf32>
    %10 = arith.truncf %9 : vector<136x128xf32> to vector<136x128xbf16>
    %c1 = arith.constant 1 : index
    %c0_7 = arith.constant 0 : index
    %c0_8 = arith.constant 0 : index
    %11 = vector.load %arg2[%c1, %c0_7, %c0_8] : memref<6x128x128xbf16, #tpu.memory_space<vmem>>, vector<1x128x128xbf16>
    %12 = vector.shape_cast %11 : vector<1x128x128xbf16> to vector<128x128xbf16>
    %cst_9 = arith.constant dense<0.000000e+00> : vector<136x128xf32>
    %13 = tpu.matmul %10, %12, %cst_9 {dimension_numbers = #tpu.dot_dimension_numbers<[1], [0], [0], [1], [0, 0, 1, 1], [], []>} : vector<136x128xbf16>, vector<128x128xbf16>, vector<136x128xf32> -> vector<136x128xf32>
    %c1_10 = arith.constant 1 : index
    %c0_11 = arith.constant 0 : index
    %c0_12 = arith.constant 0 : index
    %14 = vector.load %arg3[%c1_10, %c0_11, %c0_12] : memref<6x1x128xf32, #tpu.memory_space<vmem>>, vector<1x1x128xf32>
    %15 = vector.shape_cast %14 : vector<1x1x128xf32> to vector<1x128xf32>
    %16 = vector.broadcast %15 : vector<1x128xf32> to vector<136x128xf32>
    %17 = arith.addf %13, %16 : vector<136x128xf32>
    %18 = math.tanh %17 : vector<136x128xf32>
    %19 = arith.truncf %18 : vector<136x128xf32> to vector<136x128xbf16>
    %c2 = arith.constant 2 : index
    %c0_13 = arith.constant 0 : index
    %c0_14 = arith.constant 0 : index
    %20 = vector.load %arg2[%c2, %c0_13, %c0_14] : memref<6x128x128xbf16, #tpu.memory_space<vmem>>, vector<1x128x128xbf16>
    %21 = vector.shape_cast %20 : vector<1x128x128xbf16> to vector<128x128xbf16>
    %cst_15 = arith.constant dense<0.000000e+00> : vector<136x128xf32>
    %22 = tpu.matmul %19, %21, %cst_15 {dimension_numbers = #tpu.dot_dimension_numbers<[1], [0], [0], [1], [0, 0, 1, 1], [], []>} : vector<136x128xbf16>, vector<128x128xbf16>, vector<136x128xf32> -> vector<136x128xf32>
    %c2_16 = arith.constant 2 : index
    %c0_17 = arith.constant 0 : index
    %c0_18 = arith.constant 0 : index
    %23 = vector.load %arg3[%c2_16, %c0_17, %c0_18] : memref<6x1x128xf32, #tpu.memory_space<vmem>>, vector<1x1x128xf32>
    %24 = vector.shape_cast %23 : vector<1x1x128xf32> to vector<1x128xf32>
    %25 = vector.broadcast %24 : vector<1x128xf32> to vector<136x128xf32>
    %26 = arith.addf %22, %25 : vector<136x128xf32>
    %27 = arith.truncf %26 : vector<136x128xf32> to vector<136x128xbf16>
    %c3 = arith.constant 3 : index
    %c0_19 = arith.constant 0 : index
    %c0_20 = arith.constant 0 : index
    %28 = vector.load %arg2[%c3, %c0_19, %c0_20] : memref<6x128x128xbf16, #tpu.memory_space<vmem>>, vector<1x128x128xbf16>
    %29 = vector.shape_cast %28 : vector<1x128x128xbf16> to vector<128x128xbf16>
    %cst_21 = arith.constant dense<0.000000e+00> : vector<136x128xf32>
    %30 = tpu.matmul %27, %29, %cst_21 {dimension_numbers = #tpu.dot_dimension_numbers<[1], [0], [0], [1], [0, 0, 1, 1], [], []>} : vector<136x128xbf16>, vector<128x128xbf16>, vector<136x128xf32> -> vector<136x128xf32>
    %c3_22 = arith.constant 3 : index
    %c0_23 = arith.constant 0 : index
    %c0_24 = arith.constant 0 : index
    %31 = vector.load %arg3[%c3_22, %c0_23, %c0_24] : memref<6x1x128xf32, #tpu.memory_space<vmem>>, vector<1x1x128xf32>
    %32 = vector.shape_cast %31 : vector<1x1x128xf32> to vector<1x128xf32>
    %33 = vector.broadcast %32 : vector<1x128xf32> to vector<136x128xf32>
    %34 = arith.addf %30, %33 : vector<136x128xf32>
    %35 = math.tanh %34 : vector<136x128xf32>
    %36 = arith.truncf %35 : vector<136x128xf32> to vector<136x128xbf16>
    %c4 = arith.constant 4 : index
    %c0_25 = arith.constant 0 : index
    %c0_26 = arith.constant 0 : index
    %37 = vector.load %arg2[%c4, %c0_25, %c0_26] : memref<6x128x128xbf16, #tpu.memory_space<vmem>>, vector<1x128x128xbf16>
    %38 = vector.shape_cast %37 : vector<1x128x128xbf16> to vector<128x128xbf16>
    %cst_27 = arith.constant dense<0.000000e+00> : vector<136x128xf32>
    %39 = tpu.matmul %36, %38, %cst_27 {dimension_numbers = #tpu.dot_dimension_numbers<[1], [0], [0], [1], [0, 0, 1, 1], [], []>} : vector<136x128xbf16>, vector<128x128xbf16>, vector<136x128xf32> -> vector<136x128xf32>
    %c4_28 = arith.constant 4 : index
    %c0_29 = arith.constant 0 : index
    %c0_30 = arith.constant 0 : index
    %40 = vector.load %arg3[%c4_28, %c0_29, %c0_30] : memref<6x1x128xf32, #tpu.memory_space<vmem>>, vector<1x1x128xf32>
    %41 = vector.shape_cast %40 : vector<1x1x128xf32> to vector<1x128xf32>
    %42 = vector.broadcast %41 : vector<1x128xf32> to vector<136x128xf32>
    %43 = arith.addf %39, %42 : vector<136x128xf32>
    %44 = math.tanh %43 : vector<136x128xf32>
    %45 = arith.truncf %44 : vector<136x128xf32> to vector<136x128xbf16>
    %c5 = arith.constant 5 : index
    %c0_31 = arith.constant 0 : index
    %c0_32 = arith.constant 0 : index
    %46 = vector.load %arg2[%c5, %c0_31, %c0_32] : memref<6x128x128xbf16, #tpu.memory_space<vmem>>, vector<1x128x128xbf16>
    %47 = vector.shape_cast %46 : vector<1x128x128xbf16> to vector<128x128xbf16>
    %cst_33 = arith.constant dense<0.000000e+00> : vector<136x128xf32>
    %48 = tpu.matmul %45, %47, %cst_33 {dimension_numbers = #tpu.dot_dimension_numbers<[1], [0], [0], [1], [0, 0, 1, 1], [], []>} : vector<136x128xbf16>, vector<128x128xbf16>, vector<136x128xf32> -> vector<136x128xf32>
    %c5_34 = arith.constant 5 : index
    %c0_35 = arith.constant 0 : index
    %c0_36 = arith.constant 0 : index
    %49 = vector.load %arg3[%c5_34, %c0_35, %c0_36] : memref<6x1x128xf32, #tpu.memory_space<vmem>>, vector<1x1x128xf32>
    %50 = vector.shape_cast %49 : vector<1x1x128xf32> to vector<1x128xf32>
    %51 = vector.broadcast %50 : vector<1x128xf32> to vector<136x128xf32>
    %52 = arith.addf %48, %51 : vector<136x128xf32>
    %53 = vector.extract_strided_slice %52 {offsets = [0, 0], sizes = [136, 8], strides = [1, 1]} : vector<136x128xf32> to vector<136x8xf32>
    %c0_37 = arith.constant 0 : index
    %c0_38 = arith.constant 0 : index
    %54 = vector.load %arg4[%c0_37, %c0_38] : memref<136x8xf32, #tpu.memory_space<vmem>>, vector<136x8xf32>
    tpu.vector_store %arg4[%c0_37, %c0_38], %53 {strides = array<i32>} : memref<136x8xf32, #tpu.memory_space<vmem>>, vector<136x8xf32>,
    return
  }
  func.func @transform_0(%arg0: i32) -> (i32, i32) {
    %c0_i32 = arith.constant 0 : i32
    %c0_i32_0 = arith.constant 0 : i32
    return %arg0, %c0_i32 : i32, i32
  }
  func.func @transform_1(%arg0: i32) -> (i32, i32, i32) {
    %c0_i32 = arith.constant 0 : i32
    %c0_i32_0 = arith.constant 0 : i32
    %c0_i32_1 = arith.constant 0 : i32
    %c0_i32_2 = arith.constant 0 : i32
    return %c0_i32, %c0_i32_0, %c0_i32_1 : i32, i32, i32
  }
  func.func @transform_2(%arg0: i32) -> (i32, i32, i32) {
    %c0_i32 = arith.constant 0 : i32
    %c0_i32_0 = arith.constant 0 : i32
    %c0_i32_1 = arith.constant 0 : i32
    %c0_i32_2 = arith.constant 0 : i32
    return %c0_i32, %c0_i32_0, %c0_i32_1 : i32, i32, i32
  }
  func.func @transform_3(%arg0: i32) -> (i32, i32) {
    %c0_i32 = arith.constant 0 : i32
    %c0_i32_0 = arith.constant 0 : i32
    return %arg0, %c0_i32 : i32, i32
  }
}

</mosaic_0001>

<llo_original>
// kernel: tpu_custom_call.1
$region0: #{tpu_custom_call.1}
  #allocation0 [shape = 'u32[]', space=smem, size = 0x4, offset = 0x4, fixed_abs, tag = 'smem constant byte address 0x4 - core index']
  #allocation1 [shape = 'u32[144,128]{1,0:T(1,128)}', space=vmem, size = 0x12000, scoped, tag = 'internal scratch']
  %s0 = inlined_call_operand.vmem [shape: f32[260,32], index: 0, kind: input, shape index: {}]
  %s1 = inlined_call_operand.hbm [shape: bf16[6,128,128], index: 1, kind: input, shape index: {}]
  %s2 = inlined_call_operand.vmem [shape: f32[6,1,128], index: 2, kind: input, shape index: {}]
  %s3 = inlined_call_operand.vmem [shape: f32[260,8], index: 3, kind: output, shape index: {}]
  %s4 = sld [smem:[#allocation0]]
  $region97: #{tpu_custom_call.1} parent=0
    _
  %s6 = ssub.s32 1, %s4
  %s7 = scalar_select 0, %s6, %s4
  $region1: #{tpu_custom_call.1} parent=0
    #allocation2 [shape = 'u8[196608]{0}', space=vmem, size = 0x30000, scoped, tag = 'input window, operand 1, single buffered']
    #allocation3 [shape = 's32[2]{0}', space=sflag, size = 0x8, scoped, tag = 'scoped memory for tpu_custom_call.1']
    #allocation4 [shape = 'u8[139264]{0}', space=vmem, size = 0x22000, scoped, tag = 'output window, operand 0']
    %8 = vsyncpa [#allocation3], 0
    loop: start=0, step=1, limit=4
    $region2: #{tpu_custom_call.1} parent=1 // loop_pre_header
      _
    $region3: #{tpu_custom_call.1} parent=1 // loop_header
      %s10 = sphi 0, %s14
      %p11 = scmp.ge.s32.totalorder %s10, 4
      %s20 = sphi 0, %s22
      %s23 = sphi 0, %s20
      %s24 = sphi 0, %s23
      %s40 = sphi 0, %s24
      %s44 = sphi 0, %s44
      %s46 = sphi 0, %s44
      %s47 = sphi 0, %s46
      %s61 = sphi 0, %s47
      %s65 = sphi 0, %s65
      %s67 = sphi 0, %s65
      %s68 = sphi 0, %s67
      %s82 = sphi 0, %s68
      %s88 = sphi 0, %s90
      %s91 = sphi 0, %s88
      %s92 = sphi 0, %s91
      %s108 = sphi 0, %s92
    $region4: #{tpu_custom_call.1} parent=1 // loop_header_branch
      %13 = sbr.rel (%p11) target = $region8
    $region5: #{tpu_custom_call.1} parent=1 // loop_body
      %s15 = ssub.s32 %s10, 1
      %s16 = ssub.s32 %s10, 2
      %s17 = sadd.s32 %s10, 1
      %s18 = ssub.s32 %s10, %s17
      %p19 = scmp.eq.s32.totalorder %s18, 0
      %s21 = sadd.s32 %s20, 1
      %s22 = scalar_select %p19, %s20, %s21
      %p25 = pneg %p19
      %p26 = scmp.eq.s32.totalorder %s10, 1
      %p27 = por %p25, %p26
      %p28 = scmp.ne.s32.totalorder %s20, %s23
      %p29 = scmp.eq.s32.totalorder %s10, 0
      %p30 = por %p28, %p29
      %p31 = scmp.ne.s32.totalorder %s20, %s23
      %p32 = scmp.eq.s32.totalorder %s15, 1
      %p33 = por %p31, %p32
      %p34 = scmp.ne.s32.totalorder %s23, %s24
      %p35 = scmp.eq.s32.totalorder %s15, 0
      %p36 = por %p34, %p35
      %p37 = scmp.ne.s32.totalorder %s23, %s24
      %p38 = scmp.eq.s32.totalorder %s16, 1
      %p39 = por %p37, %p38
      %p41 = scmp.ne.s32.totalorder %s24, %s40
      %p42 = scmp.eq.s32.totalorder %s16, 0
      %p43 = por %p41, %p42
      %s45 = sadd.s32 %s44, 1
      %p48 = scmp.eq.s32.totalorder %s10, 1
      %p49 = scmp.ne.s32.totalorder %s44, %s46
      %p50 = scmp.eq.s32.totalorder %s10, 0
      %p51 = por %p49, %p50
      %p52 = scmp.ne.s32.totalorder %s44, %s46
      %p53 = scmp.eq.s32.totalorder %s15, 1
      %p54 = por %p52, %p53
      %p55 = scmp.ne.s32.totalorder %s46, %s47
      %p56 = scmp.eq.s32.totalorder %s15, 0
      %p57 = por %p55, %p56
      %p58 = scmp.ne.s32.totalorder %s46, %s47
      %p59 = scmp.eq.s32.totalorder %s16, 1
      %p60 = por %p58, %p59
      %p62 = scmp.ne.s32.totalorder %s47, %s61
      %p63 = scmp.eq.s32.totalorder %s16, 0
      %p64 = por %p62, %p63
      %s66 = sadd.s32 %s65, 1
      %p69 = scmp.eq.s32.totalorder %s10, 1
      %p70 = scmp.ne.s32.totalorder %s65, %s67
      %p71 = scmp.eq.s32.totalorder %s10, 0
      %p72 = por %p70, %p71
      %p73 = scmp.ne.s32.totalorder %s65, %s67
      %p74 = scmp.eq.s32.totalorder %s15, 1
      %p75 = por %p73, %p74
      %p76 = scmp.ne.s32.totalorder %s67, %s68
      %p77 = scmp.eq.s32.totalorder %s15, 0
      %p78 = por %p76, %p77
      %p79 = scmp.ne.s32.totalorder %s67, %s68
      %p80 = scmp.eq.s32.totalorder %s16, 1
      %p81 = por %p79, %p80
      %p83 = scmp.ne.s32.totalorder %s68, %s82
      %p84 = scmp.eq.s32.totalorder %s16, 0
      %p85 = por %p83, %p84
      %s86 = ssub.s32 %s10, %s17
      %p87 = scmp.eq.s32.totalorder %s86, 0
      %s89 = sadd.s32 %s88, 1
      %s90 = scalar_select %p87, %s88, %s89
      %p93 = pneg %p87
      %p94 = scmp.eq.s32.totalorder %s10, 1
      %p95 = por %p93, %p94
      %p96 = scmp.ne.s32.totalorder %s88, %s91
      %p97 = scmp.eq.s32.totalorder %s10, 0
      %p98 = por %p96, %p97
      %p99 = scmp.ne.s32.totalorder %s88, %s91
      %p100 = scmp.eq.s32.totalorder %s15, 1
      %p101 = por %p99, %p100
      %p102 = scmp.ne.s32.totalorder %s91, %s92
      %p103 = scmp.eq.s32.totalorder %s15, 0
      %p104 = por %p102, %p103
      %p105 = scmp.ne.s32.totalorder %s91, %s92
      %p106 = scmp.eq.s32.totalorder %s16, 1
      %p107 = por %p105, %p106
      %p109 = scmp.ne.s32.totalorder %s92, %s108
      %p110 = scmp.eq.s32.totalorder %s16, 0
      %p111 = por %p109, %p110
      %p112 = scmp.le.s32.totalorder 1, %s10
      %p113 = scmp.lt.s32.totalorder %s10, 3
      %p114 = pnand %p112, %p113
      %p115 = pneg %p114
      // Predicated region
      $region9: #{tpu_custom_call.1} parent=5 // pred_check
        _
      $region10: #{tpu_custom_call.1} parent=5 // pred_check_branch
        %117 = sbr.rel (%p114) target = $region12
      $region11: #{tpu_custom_call.1} parent=5 // pred_region
        %s118 = ssub.s32 %s10, 1
        // Predicated region
        $region13: #{tpu_custom_call.1} parent=11 // pred_check
          %p119 = pneg %p57
        $region14: #{tpu_custom_call.1} parent=11 // pred_check_branch
          %121 = sbr.rel (%p119) target = $region16
        $region15: #{tpu_custom_call.1} parent=11 // pred_region
          %s123 = ssub.s32 6144, 6144
          %124 = vsyncadd [#allocation3], %s123
          %s125 = sshll.u32 [#allocation2], 4
          %s126 = int_to_ptr.vmem [resolvable:$true] %s125
          %131 = dma.hbm_to_vmem [thread:$0]  %s1, 6144, %s126, [#allocation3], 64, 64, 4
        $region16: #{tpu_custom_call.1} parent=11 // pred_fallthru
          _
        // Predicated region
        $region17: #{tpu_custom_call.1} parent=11 // pred_check
          %p132 = pneg %p78
        $region18: #{tpu_custom_call.1} parent=11 // pred_check_branch
          %134 = sbr.rel (%p132) target = $region20
        $region19: #{tpu_custom_call.1} parent=11 // pred_region
          _
        $region20: #{tpu_custom_call.1} parent=11 // pred_fallthru
          _
      $region12: #{tpu_custom_call.1} parent=5 // pred_fallthru
        _
      %p135 = scmp.lt.s32.totalorder %s10, 2
      // Predicated region
      $region21: #{tpu_custom_call.1} parent=5 // pred_check
        %p136 = pneg %p135
      $region22: #{tpu_custom_call.1} parent=5 // pred_check_branch
        %138 = sbr.rel (%p136) target = $region24
      $region23: #{tpu_custom_call.1} parent=5 // pred_region
        // Predicated region
        $region25: #{tpu_custom_call.1} parent=23 // pred_check
          %p139 = pneg %p30
        $region26: #{tpu_custom_call.1} parent=23 // pred_check_branch
          %141 = sbr.rel (%p139) target = $region28
        $region27: #{tpu_custom_call.1} parent=23 // pred_region
          %s142 = smul.u32 17, %s10
          %s143 = ssub.s32 33, %s142
          %p144 = scmp.lt.s32.totalorder %s143, 17
          %s145 = scalar_select %p144, %s143, 17
          %s146 = smul.u32 128, %s145
          %p147 = scmp.lt.s32.totalorder %s142, 32
          %s148 = scalar_select %p147, %s142, 32
          %s149 = smul.addr %s148, 8
          %s150 = scalar_lea.vmem %s0, %s149
          %s151 = smul.u32 17, %s10
          %s152 = ssub.s32 33, %s151
          %p153 = scmp.lt.s32.totalorder %s152, 17
          %s154 = scalar_select %p153, %s152, 17
          %s155 = smul.u32 128, %s154
        $region28: #{tpu_custom_call.1} parent=23 // pred_fallthru
          _
      $region24: #{tpu_custom_call.1} parent=5 // pred_fallthru
        _
      %p156 = scmp.le.s32.totalorder 1, %s10
      %p157 = scmp.lt.s32.totalorder %s10, 3
      %p158 = pnand %p156, %p157
      %p159 = pneg %p158
      // Predicated region
      $region29: #{tpu_custom_call.1} parent=5 // pred_check
        _
      $region30: #{tpu_custom_call.1} parent=5 // pred_check_branch
        %161 = sbr.rel (%p158) target = $region32
      $region31: #{tpu_custom_call.1} parent=5 // pred_region
        %s162 = ssub.s32 %s10, 1
        // Predicated region
        $region33: #{tpu_custom_call.1} parent=31 // pred_check
          %p163 = pneg %p57
        $region34: #{tpu_custom_call.1} parent=31 // pred_check_branch
          %165 = sbr.rel (%p163) target = $region36
        $region35: #{tpu_custom_call.1} parent=31 // pred_region
          %166 = dma.done [#allocation3], 6144
        $region36: #{tpu_custom_call.1} parent=31 // pred_fallthru
          _
        %s167 = smul.u32 17, %s15
        %s168 = ssub.s32 33, %s167
        %p169 = scmp.lt.s32.totalorder %s168, 17
        %s170 = scalar_select %p169, %s168, 17
        %s171 = smul.u32 128, %s170
        %p172 = scmp.lt.s32.totalorder %s167, 32
        %s173 = scalar_select %p172, %s167, 32
        %s174 = smul.addr %s173, 8
        %s175 = scalar_lea.vmem %s0, %s174
        %p176 = pneg %p36
        %p177 = pneg %p33
        %p178 = pneg %p57
        %p179 = pneg %p54
        %p180 = pneg %p78
        %p181 = pneg %p75
        %p182 = pneg %p104
        %p183 = pneg %p101
        %s184 = sand.u32 %s91, 1
        %s185 = sand.u32 %s91, 1
        %s186 = smul.addr %s185, 136
        %s187 = scalar_lea.vmem [#allocation4], %s186
        %s188 = smul.u32 17, %s15
        %s189 = ssub.s32 33, %s188
        %p190 = scmp.lt.s32.totalorder %s189, 17
        %s191 = scalar_select %p190, %s189, 17
        %s192 = smul.u32 128, %s191
        %p193 = scmp.lt.s32.totalorder %s188, 32
        %s194 = scalar_select %p193, %s188, 32
        %s195 = smul.addr %s194, 8
        %s196 = scalar_lea.vmem %s0, %s195
        %s197 = smul.u32 17, %s15
        %s198 = ssub.s32 33, %s197
        %p199 = scmp.lt.s32.totalorder %s198, 17
        %s200 = scalar_select %p199, %s198, 17
        %s201 = smul.u32 128, %s200
        %s202 = smul.u32 17, %s15
        %s203 = ssub.s32 33, %s202
        %p204 = scmp.lt.s32.totalorder %s203, 17
        %s205 = scalar_select %p204, %s203, 17
        %s206 = smul.u32 128, %s205
        %v208 = vld [vmem:[%s196] sm:$0xff]
        %v209 = vld [vmem:[%s196 + $0x8] sm:$0xff]
        %v210 = vld [vmem:[%s196 + $0x10] sm:$0xff]
        %v211 = vld [vmem:[%s196 + $0x18] sm:$0xff]
        %v212 = vld [vmem:[%s196 + $0x20] sm:$0xff]
        %v213 = vld [vmem:[%s196 + $0x28] sm:$0xff]
        %v214 = vld [vmem:[%s196 + $0x30] sm:$0xff]
        %v215 = vld [vmem:[%s196 + $0x38] sm:$0xff]
        %v216 = vld [vmem:[%s196 + $0x40] sm:$0xff]
        %v217 = vld [vmem:[%s196 + $0x48] sm:$0xff]
        %v218 = vld [vmem:[%s196 + $0x50] sm:$0xff]
        %v219 = vld [vmem:[%s196 + $0x58] sm:$0xff]
        %v220 = vld [vmem:[%s196 + $0x60] sm:$0xff]
        %v221 = vld [vmem:[%s196 + $0x68] sm:$0xff]
        %v222 = vld [vmem:[%s196 + $0x70] sm:$0xff]
        %v223 = vld [vmem:[%s196 + $0x78] sm:$0xff]
        %v224 = vld [vmem:[%s196 + $0x80] sm:$0xff]
        %v225 = vpack.c.bf16 %v209, %v208
        %v226 = vpack.c.bf16 %v211, %v210
        %v227 = vpack.c.bf16 %v213, %v212
        %v228 = vpack.c.bf16 %v215, %v214
        %v229 = vpack.c.bf16 %v217, %v216
        %v230 = vpack.c.bf16 %v219, %v218
        %v231 = vpack.c.bf16 %v221, %v220
        %v232 = vpack.c.bf16 %v223, %v222
        %v233 = vpack.c.bf16 %v224, %v224
        %v234 = vld [vmem:[#allocation2] sm:$0xf]
        %v235 = vld [vmem:[#allocation2 + $0x4] sm:$0xf]
        %v236 = vld [vmem:[#allocation2 + $0x8] sm:$0xf]
        %v237 = vld [vmem:[#allocation2 + $0xc] sm:$0xf]
        %v238 = vld [vmem:[%s2] sm:$0x1]
        %v240 = vlaneseq
        %v241 = vshrl.u32 %v240, 7
        %v242 = vsub.s32 0, %v241
        %v243 = vrot.slane %v238, %v242
        %v249 = vunpack.c.l.b16 %v234
        %v250 = vunpack.c.l.b16 %v235
        %v251 = vunpack.c.l.b16 %v236
        %v252 = vunpack.c.l.b16 %v237
        %v253 = vpack.c.b16 %v250, %v249
        %v254 = vpack.c.b16 %v252, %v251
        %vm257 = vcmask 261120
        %v259 = vsel %vm257, %v225, 0
        %v262 = vsel %vm257, %v226, 0
        %v265 = vsel %vm257, %v227, 0
        %v268 = vsel %vm257, %v228, 0
        %v271 = vsel %vm257, %v229, 0
        %v274 = vsel %vm257, %v230, 0
        %v277 = vsel %vm257, %v231, 0
        %v280 = vsel %vm257, %v232, 0
        %v283 = vsel %vm257, %v233, 0
        %285 = vmatprep.subr.bf16.mxu0 0
        %286 = vmatpush1.bf16.msra.mxu0 %v253
        %287 = vmatprep.subr.bf16.mxu0 0
        %288 = vmatpush1.bf16.msra.mxu0 %v254
        %289 = vmatprep.subr.bf16.mxu0 0
        %290 = vmatpush1.bf16.msra.mxu0 0
        %291 = vmatprep.subr.bf16.mxu0 0
        %292 = vmatpush1.bf16.msra.mxu0 0
        %293 = vmatprep.subr.bf16.mxu0 0
        %294 = vmatpush1.bf16.msra.mxu0 0
        %295 = vmatprep.subr.bf16.mxu0 0
        %296 = vmatpush1.bf16.msra.mxu0 0
        %297 = vmatprep.subr.bf16.mxu0 0
        %298 = vmatpush1.bf16.msra.mxu0 0
        %299 = vmatprep.subr.bf16.mxu0 0
        %300 = vmatpush1.bf16.msra.mxu0 0
        %301 = vmatprep.subr.bf16.mxu0 0
        %302 = vmatpush1.bf16.msra.mxu0 0
        %303 = vmatprep.subr.bf16.mxu0 0
        %304 = vmatpush1.bf16.msra.mxu0 0
        %305 = vmatprep.subr.bf16.mxu0 0
        %306 = vmatpush1.bf16.msra.mxu0 0
        %307 = vmatprep.subr.bf16.mxu0 0
        %308 = vmatpush1.bf16.msra.mxu0 0
        %309 = vmatprep.subr.bf16.mxu0 0
        %310 = vmatpush1.bf16.msra.mxu0 0
        %311 = vmatprep.subr.bf16.mxu0 0
        %312 = vmatpush1.bf16.msra.mxu0 0
        %313 = vmatprep.subr.bf16.mxu0 0
        %314 = vmatpush1.bf16.msra.mxu0 0
        %315 = vmatprep.subr.bf16.mxu0 0
        %316 = vmatpush1.bf16.msra.mxu0 0
        %317 = vmatprep.mubr.bf16.mxu0 0
        %318 = vmatmul.mubr.bf16.gmra.mrb[0].mxu0 %v259
        %v319 = vpop.f32.mrb[0].mxu0
        %v320 = vadd.f32 %v243, %v319
        %v321 = vpop.f32.mrb[0].mxu0
        %v322 = vpop.f32.mrb[0].mxu0
        %v323 = vadd.f32 %v243, %v322
        %v324 = vpop.f32.mrb[0].mxu0
        %325 = vmatprep.mubr.bf16.mxu0 0
        %326 = vmatmul.mubr.bf16.gmra.mrb[0].mxu0 %v262
        %v327 = vpop.f32.mrb[0].mxu0
        %v328 = vadd.f32 %v243, %v327
        %v329 = vpop.f32.mrb[0].mxu0
        %v330 = vpop.f32.mrb[0].mxu0
        %v331 = vadd.f32 %v243, %v330
        %v332 = vpop.f32.mrb[0].mxu0
        %333 = vmatprep.mubr.bf16.mxu0 0
        %334 = vmatmul.mubr.bf16.gmra.mrb[0].mxu0 %v265
        %v335 = vpop.f32.mrb[0].mxu0
        %v336 = vadd.f32 %v243, %v335
        %v337 = vpop.f32.mrb[0].mxu0
        %v338 = vpop.f32.mrb[0].mxu0
        %v339 = vadd.f32 %v243, %v338
        %v340 = vpop.f32.mrb[0].mxu0
        %341 = vmatprep.mubr.bf16.mxu0 0
        %342 = vmatmul.mubr.bf16.gmra.mrb[0].mxu0 %v268
        %v343 = vpop.f32.mrb[0].mxu0
        %v344 = vadd.f32 %v243, %v343
        %v345 = vpop.f32.mrb[0].mxu0
        %v346 = vpop.f32.mrb[0].mxu0
        %v347 = vadd.f32 %v243, %v346
        %v348 = vpop.f32.mrb[0].mxu0
        %349 = vmatprep.mubr.bf16.mxu0 0
        %350 = vmatmul.mubr.bf16.gmra.mrb[0].mxu0 %v271
        %v351 = vpop.f32.mrb[0].mxu0
        %v352 = vadd.f32 %v243, %v351
        %v353 = vpop.f32.mrb[0].mxu0
        %v354 = vpop.f32.mrb[0].mxu0
        %v355 = vadd.f32 %v243, %v354
        %v356 = vpop.f32.mrb[0].mxu0
        %357 = vmatprep.mubr.bf16.mxu0 0
        %358 = vmatmul.mubr.bf16.gmra.mrb[0].mxu0 %v274
        %v359 = vpop.f32.mrb[0].mxu0
        %v360 = vadd.f32 %v243, %v359
        %v361 = vpop.f32.mrb[0].mxu0
        %v362 = vpop.f32.mrb[0].mxu0
        %v363 = vadd.f32 %v243, %v362
        %v364 = vpop.f32.mrb[0].mxu0
        %365 = vmatprep.mubr.bf16.mxu0 0
        %366 = vmatmul.mubr.bf16.gmra.mrb[0].mxu0 %v277
        %v367 = vpop.f32.mrb[0].mxu0
        %v368 = vadd.f32 %v243, %v367
        %v369 = vpop.f32.mrb[0].mxu0
        %v370 = vpop.f32.mrb[0].mxu0
        %v371 = vadd.f32 %v243, %v370
        %v372 = vpop.f32.mrb[0].mxu0
        %373 = vmatprep.mubr.bf16.mxu0 0
        %374 = vmatmul.mubr.bf16.gmra.mrb[0].mxu0 %v280
        %v375 = vpop.f32.mrb[0].mxu0
        %v376 = vadd.f32 %v243, %v375
        %v377 = vpop.f32.mrb[0].mxu0
        %v378 = vpop.f32.mrb[0].mxu0
        %v379 = vadd.f32 %v243, %v378
        %v380 = vpop.f32.mrb[0].mxu0
        %381 = vmatprep.mubr.bf16.mxu0 0
        %382 = vmatmul.mubr.bf16.gmra.mrb[0].mxu0 %v283
        %v383 = vpop.f32.mrb[0].mxu0
        %v384 = vadd.f32 %v243, %v383
        %v385 = vpop.f32.mrb[0].mxu0
        %v386 = vpop.f32.mrb[0].mxu0
        %v387 = vpop.f32.mrb[0].mxu0
        %388 = vdwg.mxu0
        %v389 = vtanh.pop %v320
        %v390 = vtanh.pop %v323
        %v391 = vtanh.pop %v328
        %v392 = vtanh.pop %v331
        %v393 = vtanh.pop %v336
        %v394 = vtanh.pop %v339
        %v395 = vtanh.pop %v344
        %v396 = vtanh.pop %v347
        %v397 = vtanh.pop %v352
        %v398 = vtanh.pop %v355
        %v399 = vtanh.pop %v360
        %v400 = vtanh.pop %v363
        %v401 = vtanh.pop %v368
        %v402 = vtanh.pop %v371
        %v403 = vtanh.pop %v376
        %v404 = vtanh.pop %v379
        %v405 = vtanh.pop %v384
        %v406 = vpack.c.bf16 %v390, %v389
        %v407 = vpack.c.bf16 %v392, %v391
        %v408 = vpack.c.bf16 %v394, %v393
        %v409 = vpack.c.bf16 %v396, %v395
        %v410 = vpack.c.bf16 %v398, %v397
        %v411 = vpack.c.bf16 %v400, %v399
        %v412 = vpack.c.bf16 %v402, %v401
        %v413 = vpack.c.bf16 %v404, %v403
        %v414 = vpack.c.bf16 %v405, %v405
        %s415 = scalar_lea.vmem [#allocation2], 64
        %v416 = vld [vmem:[%s415] sm:$0xf]
        %v417 = vld [vmem:[%s415 + $0x4] sm:$0xf]
        %v418 = vld [vmem:[%s415 + $0x8] sm:$0xf]
        %v419 = vld [vmem:[%s415 + $0xc] sm:$0xf]
        %v420 = vld [vmem:[%s415 + $0x10] sm:$0xf]
        %v421 = vld [vmem:[%s415 + $0x14] sm:$0xf]
        %v422 = vld [vmem:[%s415 + $0x18] sm:$0xf]
        %v423 = vld [vmem:[%s415 + $0x1c] sm:$0xf]
        %v424 = vld [vmem:[%s415 + $0x20] sm:$0xf]
        %v425 = vld [vmem:[%s415 + $0x24] sm:$0xf]
        %v426 = vld [vmem:[%s415 + $0x28] sm:$0xf]
        %v427 = vld [vmem:[%s415 + $0x2c] sm:$0xf]
        %v428 = vld [vmem:[%s415 + $0x30] sm:$0xf]
        %v429 = vld [vmem:[%s415 + $0x34] sm:$0xf]
        %v430 = vld [vmem:[%s415 + $0x38] sm:$0xf]
        %v431 = vld [vmem:[%s415 + $0x3c] sm:$0xf]
        %s432 = scalar_lea.vmem %s2, 1
        %v433 = vld [vmem:[%s432] sm:$0x1]
        %v435 = vlaneseq
        %v436 = vshrl.u32 %v435, 7
        %v437 = vsub.s32 0, %v436
        %v438 = vrot.slane %v433, %v437
        %v456 = vunpack.c.l.b16 %v416
        %v457 = vunpack.c.l.b16 %v417
        %v458 = vunpack.c.l.b16 %v418
        %v459 = vunpack.c.l.b16 %v419
        %v460 = vunpack.c.l.b16 %v420
        %v461 = vunpack.c.l.b16 %v421
        %v462 = vunpack.c.l.b16 %v422
        %v463 = vunpack.c.l.b16 %v423
        %v464 = vunpack.c.l.b16 %v424
        %v465 = vunpack.c.l.b16 %v425
        %v466 = vunpack.c.l.b16 %v426
        %v467 = vunpack.c.l.b16 %v427
        %v468 = vunpack.c.l.b16 %v428
        %v469 = vunpack.c.l.b16 %v429
        %v470 = vunpack.c.l.b16 %v430
        %v471 = vunpack.c.l.b16 %v431
        %v472 = vpack.c.b16 %v457, %v456
        %v473 = vpack.c.b16 %v459, %v458
        %v474 = vpack.c.b16 %v461, %v460
        %v475 = vpack.c.b16 %v463, %v462
        %v476 = vpack.c.b16 %v465, %v464
        %v477 = vpack.c.b16 %v467, %v466
        %v478 = vpack.c.b16 %v469, %v468
        %v479 = vpack.c.b16 %v471, %v470
        %488 = vmatprep.subr.bf16.mxu0 0
        %489 = vmatpush1.bf16.msra.mxu0 %v472
        %490 = vmatprep.subr.bf16.mxu0 0
        %491 = vmatpush1.bf16.msra.mxu0 %v473
        %492 = vmatprep.subr.bf16.mxu0 0
        %493 = vmatpush1.bf16.msra.mxu0 %v474
        %494 = vmatprep.subr.bf16.mxu0 0
        %495 = vmatpush1.bf16.msra.mxu0 %v475
        %496 = vmatprep.subr.bf16.mxu0 0
        %497 = vmatpush1.bf16.msra.mxu0 %v476
        %498 = vmatprep.subr.bf16.mxu0 0
        %499 = vmatpush1.bf16.msra.mxu0 %v477
        %500 = vmatprep.subr.bf16.mxu0 0
        %501 = vmatpush1.bf16.msra.mxu0 %v478
        %502 = vmatprep.subr.bf16.mxu0 0
        %503 = vmatpush1.bf16.msra.mxu0 %v479
        %504 = vmatprep.subr.bf16.mxu0 0
        %505 = vmatpush1.bf16.msra.mxu0 0
        %506 = vmatprep.subr.bf16.mxu0 0
        %507 = vmatpush1.bf16.msra.mxu0 0
        %508 = vmatprep.subr.bf16.mxu0 0
        %509 = vmatpush1.bf16.msra.mxu0 0
        %510 = vmatprep.subr.bf16.mxu0 0
        %511 = vmatpush1.bf16.msra.mxu0 0
        %512 = vmatprep.subr.bf16.mxu0 0
        %513 = vmatpush1.bf16.msra.mxu0 0
        %514 = vmatprep.subr.bf16.mxu0 0
        %515 = vmatpush1.bf16.msra.mxu0 0
        %516 = vmatprep.subr.bf16.mxu0 0
        %517 = vmatpush1.bf16.msra.mxu0 0
        %518 = vmatprep.subr.bf16.mxu0 0
        %519 = vmatpush1.bf16.msra.mxu0 0
        %520 = vmatprep.mubr.bf16.mxu0 0
        %521 = vmatmul.mubr.bf16.gmra.mrb[0].mxu0 %v406
        %v522 = vpop.f32.mrb[0].mxu0
        %v523 = vadd.f32 %v438, %v522
        %v524 = vpop.f32.mrb[0].mxu0
        %v525 = vpop.f32.mrb[0].mxu0
        %v526 = vadd.f32 %v438, %v525
        %v527 = vpop.f32.mrb[0].mxu0
        %528 = vmatprep.mubr.bf16.mxu0 0
        %529 = vmatmul.mubr.bf16.gmra.mrb[0].mxu0 %v407
        %v530 = vpop.f32.mrb[0].mxu0
        %v531 = vadd.f32 %v438, %v530
        %v532 = vpop.f32.mrb[0].mxu0
        %v533 = vpop.f32.mrb[0].mxu0
        %v534 = vadd.f32 %v438, %v533
        %v535 = vpop.f32.mrb[0].mxu0
        %536 = vmatprep.mubr.bf16.mxu0 0
        %537 = vmatmul.mubr.bf16.gmra.mrb[0].mxu0 %v408
        %v538 = vpop.f32.mrb[0].mxu0
        %v539 = vadd.f32 %v438, %v538
        %v540 = vpop.f32.mrb[0].mxu0
        %v541 = vpop.f32.mrb[0].mxu0
        %v542 = vadd.f32 %v438, %v541
        %v543 = vpop.f32.mrb[0].mxu0
        %544 = vmatprep.mubr.bf16.mxu0 0
        %545 = vmatmul.mubr.bf16.gmra.mrb[0].mxu0 %v409
        %v546 = vpop.f32.mrb[0].mxu0
        %v547 = vadd.f32 %v438, %v546
        %v548 = vpop.f32.mrb[0].mxu0
        %v549 = vpop.f32.mrb[0].mxu0
        %v550 = vadd.f32 %v438, %v549
        %v551 = vpop.f32.mrb[0].mxu0
        %552 = vmatprep.mubr.bf16.mxu0 0
        %553 = vmatmul.mubr.bf16.gmra.mrb[0].mxu0 %v410
        %v554 = vpop.f32.mrb[0].mxu0
        %v555 = vadd.f32 %v438, %v554
        %v556 = vpop.f32.mrb[0].mxu0
        %v557 = vpop.f32.mrb[0].mxu0
        %v558 = vadd.f32 %v438, %v557
        %v559 = vpop.f32.mrb[0].mxu0
        %560 = vmatprep.mubr.bf16.mxu0 0
        %561 = vmatmul.mubr.bf16.gmra.mrb[0].mxu0 %v411
        %v562 = vpop.f32.mrb[0].mxu0
        %v563 = vadd.f32 %v438, %v562
        %v564 = vpop.f32.mrb[0].mxu0
        %v565 = vpop.f32.mrb[0].mxu0
        %v566 = vadd.f32 %v438, %v565
        %v567 = vpop.f32.mrb[0].mxu0
        %568 = vmatprep.mubr.bf16.mxu0 0
        %569 = vmatmul.mubr.bf16.gmra.mrb[0].mxu0 %v412
        %v570 = vpop.f32.mrb[0].mxu0
        %v571 = vadd.f32 %v438, %v570
        %v572 = vpop.f32.mrb[0].mxu0
        %v573 = vpop.f32.mrb[0].mxu0
        %v574 = vadd.f32 %v438, %v573
        %v575 = vpop.f32.mrb[0].mxu0
        %576 = vmatprep.mubr.bf16.mxu0 0
        %577 = vmatmul.mubr.bf16.gmra.mrb[0].mxu0 %v413
        %v578 = vpop.f32.mrb[0].mxu0
        %v579 = vadd.f32 %v438, %v578
        %v580 = vpop.f32.mrb[0].mxu0
        %v581 = vpop.f32.mrb[0].mxu0
        %v582 = vadd.f32 %v438, %v581
        %v583 = vpop.f32.mrb[0].mxu0
        %584 = vmatprep.mubr.bf16.mxu0 0
        %585 = vmatmul.mubr.bf16.gmra.mrb[0].mxu0 %v414
        %v586 = vpop.f32.mrb[0].mxu0
        %v587 = vadd.f32 %v438, %v586
        %v588 = vpop.f32.mrb[0].mxu0
        %v589 = vpop.f32.mrb[0].mxu0
        %v590 = vpop.f32.mrb[0].mxu0
        %591 = vdwg.mxu0
        %v592 = vtanh.pop %v523
        %v593 = vtanh.pop %v526
        %v594 = vtanh.pop %v531
        %v595 = vtanh.pop %v534
        %v596 = vtanh.pop %v539
        %v597 = vtanh.pop %v542
        %v598 = vtanh.pop %v547
        %v599 = vtanh.pop %v550
        %v600 = vtanh.pop %v555
        %v601 = vtanh.pop %v558
        %v602 = vtanh.pop %v563
        %v603 = vtanh.pop %v566
        %v604 = vtanh.pop %v571
        %v605 = vtanh.pop %v574
        %v606 = vtanh.pop %v579
        %v607 = vtanh.pop %v582
        %v608 = vtanh.pop %v587
        %v609 = vpack.c.bf16 %v593, %v592
        %v610 = vpack.c.bf16 %v595, %v594
        %v611 = vpack.c.bf16 %v597, %v596
        %v612 = vpack.c.bf16 %v599, %v598
        %v613 = vpack.c.bf16 %v601, %v600
        %v614 = vpack.c.bf16 %v603, %v602
        %v615 = vpack.c.bf16 %v605, %v604
        %v616 = vpack.c.bf16 %v607, %v606
        %v617 = vpack.c.bf16 %v608, %v608
        %s618 = scalar_lea.vmem [#allocation2], 128
        %v619 = vld [vmem:[%s618] sm:$0xf]
        %v620 = vld [vmem:[%s618 + $0x4] sm:$0xf]
        %v621 = vld [vmem:[%s618 + $0x8] sm:$0xf]
        %v622 = vld [vmem:[%s618 + $0xc] sm:$0xf]
        %v623 = vld [vmem:[%s618 + $0x10] sm:$0xf]
        %v624 = vld [vmem:[%s618 + $0x14] sm:$0xf]
        %v625 = vld [vmem:[%s618 + $0x18] sm:$0xf]
        %v626 = vld [vmem:[%s618 + $0x1c] sm:$0xf]
        %v627 = vld [vmem:[%s618 + $0x20] sm:$0xf]
        %v628 = vld [vmem:[%s618 + $0x24] sm:$0xf]
        %v629 = vld [vmem:[%s618 + $0x28] sm:$0xf]
        %v630 = vld [vmem:[%s618 + $0x2c] sm:$0xf]
        %v631 = vld [vmem:[%s618 + $0x30] sm:$0xf]
        %v632 = vld [vmem:[%s618 + $0x34] sm:$0xf]
        %v633 = vld [vmem:[%s618 + $0x38] sm:$0xf]
        %v634 = vld [vmem:[%s618 + $0x3c] sm:$0xf]
        %s635 = scalar_lea.vmem %s2, 2
        %v636 = vld [vmem:[%s635] sm:$0x1]
        %v638 = vlaneseq
        %v639 = vshrl.u32 %v638, 7
        %v640 = vsub.s32 0, %v639
        %v641 = vrot.slane %v636, %v640
        %v659 = vunpack.c.l.b16 %v619
        %v660 = vunpack.c.l.b16 %v620
        %v661 = vunpack.c.l.b16 %v621
        %v662 = vunpack.c.l.b16 %v622
        %v663 = vunpack.c.l.b16 %v623
        %v664 = vunpack.c.l.b16 %v624
        %v665 = vunpack.c.l.b16 %v625
        %v666 = vunpack.c.l.b16 %v626
        %v667 = vunpack.c.l.b16 %v627
        %v668 = vunpack.c.l.b16 %v628
        %v669 = vunpack.c.l.b16 %v629
        %v670 = vunpack.c.l.b16 %v630
        %v671 = vunpack.c.l.b16 %v631
        %v672 = vunpack.c.l.b16 %v632
        %v673 = vunpack.c.l.b16 %v633
        %v674 = vunpack.c.l.b16 %v634
        %v675 = vpack.c.b16 %v660, %v659
        %v676 = vpack.c.b16 %v662, %v661
        %v677 = vpack.c.b16 %v664, %v663
        %v678 = vpack.c.b16 %v666, %v665
        %v679 = vpack.c.b16 %v668, %v667
        %v680 = vpack.c.b16 %v670, %v669
        %v681 = vpack.c.b16 %v672, %v671
        %v682 = vpack.c.b16 %v674, %v673
        %691 = vmatprep.subr.bf16.mxu0 0
        %692 = vmatpush1.bf16.msra.mxu0 %v675
        %693 = vmatprep.subr.bf16.mxu0 0
        %694 = vmatpush1.bf16.msra.mxu0 %v676
        %695 = vmatprep.subr.bf16.mxu0 0
        %696 = vmatpush1.bf16.msra.mxu0 %v677
        %697 = vmatprep.subr.bf16.mxu0 0
        %698 = vmatpush1.bf16.msra.mxu0 %v678
        %699 = vmatprep.subr.bf16.mxu0 0
        %700 = vmatpush1.bf16.msra.mxu0 %v679
        %701 = vmatprep.subr.bf16.mxu0 0
        %702 = vmatpush1.bf16.msra.mxu0 %v680
        %703 = vmatprep.subr.bf16.mxu0 0
        %704 = vmatpush1.bf16.msra.mxu0 %v681
        %705 = vmatprep.subr.bf16.mxu0 0
        %706 = vmatpush1.bf16.msra.mxu0 %v682
        %707 = vmatprep.subr.bf16.mxu0 0
        %708 = vmatpush1.bf16.msra.mxu0 0
        %709 = vmatprep.subr.bf16.mxu0 0
        %710 = vmatpush1.bf16.msra.mxu0 0
        %711 = vmatprep.subr.bf16.mxu0 0
        %712 = vmatpush1.bf16.msra.mxu0 0
        %713 = vmatprep.subr.bf16.mxu0 0
        %714 = vmatpush1.bf16.msra.mxu0 0
        %715 = vmatprep.subr.bf16.mxu0 0
        %716 = vmatpush1.bf16.msra.mxu0 0
        %717 = vmatprep.subr.bf16.mxu0 0
        %718 = vmatpush1.bf16.msra.mxu0 0
        %719 = vmatprep.subr.bf16.mxu0 0
        %720 = vmatpush1.bf16.msra.mxu0 0
        %721 = vmatprep.subr.bf16.mxu0 0
        %722 = vmatpush1.bf16.msra.mxu0 0
        %723 = vmatprep.mubr.bf16.mxu0 0
        %724 = vmatmul.mubr.bf16.gmra.mrb[0].mxu0 %v609
        %v725 = vpop.f32.mrb[0].mxu0
        %v726 = vadd.f32 %v641, %v725
        %v727 = vpop.f32.mrb[0].mxu0
        %v728 = vpop.f32.mrb[0].mxu0
        %v729 = vadd.f32 %v641, %v728
        %v730 = vpop.f32.mrb[0].mxu0
        %731 = vmatprep.mubr.bf16.mxu0 0
        %732 = vmatmul.mubr.bf16.gmra.mrb[0].mxu0 %v610
        %v733 = vpop.f32.mrb[0].mxu0
        %v734 = vadd.f32 %v641, %v733
        %v735 = vpop.f32.mrb[0].mxu0
        %v736 = vpop.f32.mrb[0].mxu0
        %v737 = vadd.f32 %v641, %v736
        %v738 = vpop.f32.mrb[0].mxu0
        %739 = vmatprep.mubr.bf16.mxu0 0
        %740 = vmatmul.mubr.bf16.gmra.mrb[0].mxu0 %v611
        %v741 = vpop.f32.mrb[0].mxu0
        %v742 = vadd.f32 %v641, %v741
        %v743 = vpop.f32.mrb[0].mxu0
        %v744 = vpop.f32.mrb[0].mxu0
        %v745 = vadd.f32 %v641, %v744
        %v746 = vpop.f32.mrb[0].mxu0
        %747 = vmatprep.mubr.bf16.mxu0 0
        %748 = vmatmul.mubr.bf16.gmra.mrb[0].mxu0 %v612
        %v749 = vpop.f32.mrb[0].mxu0
        %v750 = vadd.f32 %v641, %v749
        %v751 = vpop.f32.mrb[0].mxu0
        %v752 = vpop.f32.mrb[0].mxu0
        %v753 = vadd.f32 %v641, %v752
        %v754 = vpop.f32.mrb[0].mxu0
        %755 = vmatprep.mubr.bf16.mxu0 0
        %756 = vmatmul.mubr.bf16.gmra.mrb[0].mxu0 %v613
        %v757 = vpop.f32.mrb[0].mxu0
        %v758 = vadd.f32 %v641, %v757
        %v759 = vpop.f32.mrb[0].mxu0
        %v760 = vpop.f32.mrb[0].mxu0
        %v761 = vadd.f32 %v641, %v760
        %v762 = vpop.f32.mrb[0].mxu0
        %763 = vmatprep.mubr.bf16.mxu0 0
        %764 = vmatmul.mubr.bf16.gmra.mrb[0].mxu0 %v614
        %v765 = vpop.f32.mrb[0].mxu0
        %v766 = vadd.f32 %v641, %v765
        %v767 = vpop.f32.mrb[0].mxu0
        %v768 = vpop.f32.mrb[0].mxu0
        %v769 = vadd.f32 %v641, %v768
        %v770 = vpop.f32.mrb[0].mxu0
        %771 = vmatprep.mubr.bf16.mxu0 0
        %772 = vmatmul.mubr.bf16.gmra.mrb[0].mxu0 %v615
        %v773 = vpop.f32.mrb[0].mxu0
        %v774 = vadd.f32 %v641, %v773
        %v775 = vpop.f32.mrb[0].mxu0
        %v776 = vpop.f32.mrb[0].mxu0
        %v777 = vadd.f32 %v641, %v776
        %v778 = vpop.f32.mrb[0].mxu0
        %779 = vmatprep.mubr.bf16.mxu0 0
        %780 = vmatmul.mubr.bf16.gmra.mrb[0].mxu0 %v616
        %v781 = vpop.f32.mrb[0].mxu0
        %v782 = vadd.f32 %v641, %v781
        %v783 = vpop.f32.mrb[0].mxu0
        %v784 = vpop.f32.mrb[0].mxu0
        %v785 = vadd.f32 %v641, %v784
        %v786 = vpop.f32.mrb[0].mxu0
        %787 = vmatprep.mubr.bf16.mxu0 0
        %788 = vmatmul.mubr.bf16.gmra.mrb[0].mxu0 %v617
        %v789 = vpop.f32.mrb[0].mxu0
        %v790 = vadd.f32 %v641, %v789
        %v791 = vpop.f32.mrb[0].mxu0
        %v792 = vpop.f32.mrb[0].mxu0
        %v793 = vpop.f32.mrb[0].mxu0
        %794 = vdwg.mxu0
        %v795 = vpack.c.bf16 %v729, %v726
        %v796 = vpack.c.bf16 %v737, %v734
        %v797 = vpack.c.bf16 %v745, %v742
        %v798 = vpack.c.bf16 %v753, %v750
        %v799 = vpack.c.bf16 %v761, %v758
        %v800 = vpack.c.bf16 %v769, %v766
        %v801 = vpack.c.bf16 %v777, %v774
        %v802 = vpack.c.bf16 %v785, %v782
        %v803 = vpack.c.bf16 %v790, %v790
        %s804 = scalar_lea.vmem [#allocation2], 192
        %v805 = vld [vmem:[%s804] sm:$0xf]
        %v806 = vld [vmem:[%s804 + $0x4] sm:$0xf]
        %v807 = vld [vmem:[%s804 + $0x8] sm:$0xf]
        %v808 = vld [vmem:[%s804 + $0xc] sm:$0xf]
        %v809 = vld [vmem:[%s804 + $0x10] sm:$0xf]
        %v810 = vld [vmem:[%s804 + $0x14] sm:$0xf]
        %v811 = vld [vmem:[%s804 + $0x18] sm:$0xf]
        %v812 = vld [vmem:[%s804 + $0x1c] sm:$0xf]
        %v813 = vld [vmem:[%s804 + $0x20] sm:$0xf]
        %v814 = vld [vmem:[%s804 + $0x24] sm:$0xf]
        %v815 = vld [vmem:[%s804 + $0x28] sm:$0xf]
        %v816 = vld [vmem:[%s804 + $0x2c] sm:$0xf]
        %v817 = vld [vmem:[%s804 + $0x30] sm:$0xf]
        %v818 = vld [vmem:[%s804 + $0x34] sm:$0xf]
        %v819 = vld [vmem:[%s804 + $0x38] sm:$0xf]
        %v820 = vld [vmem:[%s804 + $0x3c] sm:$0xf]
        %s821 = scalar_lea.vmem %s2, 3
        %v822 = vld [vmem:[%s821] sm:$0x1]
        %v824 = vlaneseq
        %v825 = vshrl.u32 %v824, 7
        %v826 = vsub.s32 0, %v825
        %v827 = vrot.slane %v822, %v826
        %v845 = vunpack.c.l.b16 %v805
        %v846 = vunpack.c.l.b16 %v806
        %v847 = vunpack.c.l.b16 %v807
        %v848 = vunpack.c.l.b16 %v808
        %v849 = vunpack.c.l.b16 %v809
        %v850 = vunpack.c.l.b16 %v810
        %v851 = vunpack.c.l.b16 %v811
        %v852 = vunpack.c.l.b16 %v812
        %v853 = vunpack.c.l.b16 %v813
        %v854 = vunpack.c.l.b16 %v814
        %v855 = vunpack.c.l.b16 %v815
        %v856 = vunpack.c.l.b16 %v816
        %v857 = vunpack.c.l.b16 %v817
        %v858 = vunpack.c.l.b16 %v818
        %v859 = vunpack.c.l.b16 %v819
        %v860 = vunpack.c.l.b16 %v820
        %v861 = vpack.c.b16 %v846, %v845
        %v862 = vpack.c.b16 %v848, %v847
        %v863 = vpack.c.b16 %v850, %v849
        %v864 = vpack.c.b16 %v852, %v851
        %v865 = vpack.c.b16 %v854, %v853
        %v866 = vpack.c.b16 %v856, %v855
        %v867 = vpack.c.b16 %v858, %v857
        %v868 = vpack.c.b16 %v860, %v859
        %877 = vmatprep.subr.bf16.mxu0 0
        %878 = vmatpush1.bf16.msra.mxu0 %v861
        %879 = vmatprep.subr.bf16.mxu0 0
        %880 = vmatpush1.bf16.msra.mxu0 %v862
        %881 = vmatprep.subr.bf16.mxu0 0
        %882 = vmatpush1.bf16.msra.mxu0 %v863
        %883 = vmatprep.subr.bf16.mxu0 0
        %884 = vmatpush1.bf16.msra.mxu0 %v864
        %885 = vmatprep.subr.bf16.mxu0 0
        %886 = vmatpush1.bf16.msra.mxu0 %v865
        %887 = vmatprep.subr.bf16.mxu0 0
        %888 = vmatpush1.bf16.msra.mxu0 %v866
        %889 = vmatprep.subr.bf16.mxu0 0
        %890 = vmatpush1.bf16.msra.mxu0 %v867
        %891 = vmatprep.subr.bf16.mxu0 0
        %892 = vmatpush1.bf16.msra.mxu0 %v868
        %893 = vmatprep.subr.bf16.mxu0 0
        %894 = vmatpush1.bf16.msra.mxu0 0
        %895 = vmatprep.subr.bf16.mxu0 0
        %896 = vmatpush1.bf16.msra.mxu0 0
        %897 = vmatprep.subr.bf16.mxu0 0
        %898 = vmatpush1.bf16.msra.mxu0 0
        %899 = vmatprep.subr.bf16.mxu0 0
        %900 = vmatpush1.bf16.msra.mxu0 0
        %901 = vmatprep.subr.bf16.mxu0 0
        %902 = vmatpush1.bf16.msra.mxu0 0
        %903 = vmatprep.subr.bf16.mxu0 0
        %904 = vmatpush1.bf16.msra.mxu0 0
        %905 = vmatprep.subr.bf16.mxu0 0
        %906 = vmatpush1.bf16.msra.mxu0 0
        %907 = vmatprep.subr.bf16.mxu0 0
        %908 = vmatpush1.bf16.msra.mxu0 0
        %909 = vmatprep.mubr.bf16.mxu0 0
        %910 = vmatmul.mubr.bf16.gmra.mrb[0].mxu0 %v795
        %v911 = vpop.f32.mrb[0].mxu0
        %v912 = vadd.f32 %v827, %v911
        %v913 = vpop.f32.mrb[0].mxu0
        %v914 = vpop.f32.mrb[0].mxu0
        %v915 = vadd.f32 %v827, %v914
        %v916 = vpop.f32.mrb[0].mxu0
        %917 = vmatprep.mubr.bf16.mxu0 0
        %918 = vmatmul.mubr.bf16.gmra.mrb[0].mxu0 %v796
        %v919 = vpop.f32.mrb[0].mxu0
        %v920 = vadd.f32 %v827, %v919
        %v921 = vpop.f32.mrb[0].mxu0
        %v922 = vpop.f32.mrb[0].mxu0
        %v923 = vadd.f32 %v827, %v922
        %v924 = vpop.f32.mrb[0].mxu0
        %925 = vmatprep.mubr.bf16.mxu0 0
        %926 = vmatmul.mubr.bf16.gmra.mrb[0].mxu0 %v797
        %v927 = vpop.f32.mrb[0].mxu0
        %v928 = vadd.f32 %v827, %v927
        %v929 = vpop.f32.mrb[0].mxu0
        %v930 = vpop.f32.mrb[0].mxu0
        %v931 = vadd.f32 %v827, %v930
        %v932 = vpop.f32.mrb[0].mxu0
        %933 = vmatprep.mubr.bf16.mxu0 0
        %934 = vmatmul.mubr.bf16.gmra.mrb[0].mxu0 %v798
        %v935 = vpop.f32.mrb[0].mxu0
        %v936 = vadd.f32 %v827, %v935
        %v937 = vpop.f32.mrb[0].mxu0
        %v938 = vpop.f32.mrb[0].mxu0
        %v939 = vadd.f32 %v827, %v938
        %v940 = vpop.f32.mrb[0].mxu0
        %941 = vmatprep.mubr.bf16.mxu0 0
        %942 = vmatmul.mubr.bf16.gmra.mrb[0].mxu0 %v799
        %v943 = vpop.f32.mrb[0].mxu0
        %v944 = vadd.f32 %v827, %v943
        %v945 = vpop.f32.mrb[0].mxu0
        %v946 = vpop.f32.mrb[0].mxu0
        %v947 = vadd.f32 %v827, %v946
        %v948 = vpop.f32.mrb[0].mxu0
        %949 = vmatprep.mubr.bf16.mxu0 0
        %950 = vmatmul.mubr.bf16.gmra.mrb[0].mxu0 %v800
        %v951 = vpop.f32.mrb[0].mxu0
        %v952 = vadd.f32 %v827, %v951
        %v953 = vpop.f32.mrb[0].mxu0
        %v954 = vpop.f32.mrb[0].mxu0
        %v955 = vadd.f32 %v827, %v954
        %v956 = vpop.f32.mrb[0].mxu0
        %957 = vmatprep.mubr.bf16.mxu0 0
        %958 = vmatmul.mubr.bf16.gmra.mrb[0].mxu0 %v801
        %v959 = vpop.f32.mrb[0].mxu0
        %v960 = vadd.f32 %v827, %v959
        %v961 = vpop.f32.mrb[0].mxu0
        %v962 = vpop.f32.mrb[0].mxu0
        %v963 = vadd.f32 %v827, %v962
        %v964 = vpop.f32.mrb[0].mxu0
        %965 = vmatprep.mubr.bf16.mxu0 0
        %966 = vmatmul.mubr.bf16.gmra.mrb[0].mxu0 %v802
        %v967 = vpop.f32.mrb[0].mxu0
        %v968 = vadd.f32 %v827, %v967
        %v969 = vpop.f32.mrb[0].mxu0
        %v970 = vpop.f32.mrb[0].mxu0
        %v971 = vadd.f32 %v827, %v970
        %v972 = vpop.f32.mrb[0].mxu0
        %973 = vmatprep.mubr.bf16.mxu0 0
        %974 = vmatmul.mubr.bf16.gmra.mrb[0].mxu0 %v803
        %v975 = vpop.f32.mrb[0].mxu0
        %v976 = vadd.f32 %v827, %v975
        %v977 = vpop.f32.mrb[0].mxu0
        %v978 = vpop.f32.mrb[0].mxu0
        %v979 = vpop.f32.mrb[0].mxu0
        %980 = vdwg.mxu0
        %v981 = vtanh.pop %v912
        %v982 = vtanh.pop %v915
        %v983 = vtanh.pop %v920
        %v984 = vtanh.pop %v923
        %v985 = vtanh.pop %v928
        %v986 = vtanh.pop %v931
        %v987 = vtanh.pop %v936
        %v988 = vtanh.pop %v939
        %v989 = vtanh.pop %v944
        %v990 = vtanh.pop %v947
        %v991 = vtanh.pop %v952
        %v992 = vtanh.pop %v955
        %v993 = vtanh.pop %v960
        %v994 = vtanh.pop %v963
        %v995 = vtanh.pop %v968
        %v996 = vtanh.pop %v971
        %v997 = vtanh.pop %v976
        %v998 = vpack.c.bf16 %v982, %v981
        %v999 = vpack.c.bf16 %v984, %v983
        %v1000 = vpack.c.bf16 %v986, %v985
        %v1001 = vpack.c.bf16 %v988, %v987
        %v1002 = vpack.c.bf16 %v990, %v989
        %v1003 = vpack.c.bf16 %v992, %v991
        %v1004 = vpack.c.bf16 %v994, %v993
        %v1005 = vpack.c.bf16 %v996, %v995
        %v1006 = vpack.c.bf16 %v997, %v997
        %s1007 = scalar_lea.vmem [#allocation2], 256
        %v1008 = vld [vmem:[%s1007] sm:$0xf]
        %v1009 = vld [vmem:[%s1007 + $0x4] sm:$0xf]
        %v1010 = vld [vmem:[%s1007 + $0x8] sm:$0xf]
        %v1011 = vld [vmem:[%s1007 + $0xc] sm:$0xf]
        %v1012 = vld [vmem:[%s1007 + $0x10] sm:$0xf]
        %v1013 = vld [vmem:[%s1007 + $0x14] sm:$0xf]
        %v1014 = vld [vmem:[%s1007 + $0x18] sm:$0xf]
        %v1015 = vld [vmem:[%s1007 + $0x1c] sm:$0xf]
        %v1016 = vld [vmem:[%s1007 + $0x20] sm:$0xf]
        %v1017 = vld [vmem:[%s1007 + $0x24] sm:$0xf]
        %v1018 = vld [vmem:[%s1007 + $0x28] sm:$0xf]
        %v1019 = vld [vmem:[%s1007 + $0x2c] sm:$0xf]
        %v1020 = vld [vmem:[%s1007 + $0x30] sm:$0xf]
        %v1021 = vld [vmem:[%s1007 + $0x34] sm:$0xf]
        %v1022 = vld [vmem:[%s1007 + $0x38] sm:$0xf]
        %v1023 = vld [vmem:[%s1007 + $0x3c] sm:$0xf]
        %s1024 = scalar_lea.vmem %s2, 4
        %v1025 = vld [vmem:[%s1024] sm:$0x1]
        %v1027 = vlaneseq
        %v1028 = vshrl.u32 %v1027, 7
        %v1029 = vsub.s32 0, %v1028
        %v1030 = vrot.slane %v1025, %v1029
        %v1048 = vunpack.c.l.b16 %v1008
        %v1049 = vunpack.c.l.b16 %v1009
        %v1050 = vunpack.c.l.b16 %v1010
        %v1051 = vunpack.c.l.b16 %v1011
        %v1052 = vunpack.c.l.b16 %v1012
        %v1053 = vunpack.c.l.b16 %v1013
        %v1054 = vunpack.c.l.b16 %v1014
        %v1055 = vunpack.c.l.b16 %v1015
        %v1056 = vunpack.c.l.b16 %v1016
        %v1057 = vunpack.c.l.b16 %v1017
        %v1058 = vunpack.c.l.b16 %v1018
        %v1059 = vunpack.c.l.b16 %v1019
        %v1060 = vunpack.c.l.b16 %v1020
        %v1061 = vunpack.c.l.b16 %v1021
        %v1062 = vunpack.c.l.b16 %v1022
        %v1063 = vunpack.c.l.b16 %v1023
        %v1064 = vpack.c.b16 %v1049, %v1048
        %v1065 = vpack.c.b16 %v1051, %v1050
        %v1066 = vpack.c.b16 %v1053, %v1052
        %v1067 = vpack.c.b16 %v1055, %v1054
        %v1068 = vpack.c.b16 %v1057, %v1056
        %v1069 = vpack.c.b16 %v1059, %v1058
        %v1070 = vpack.c.b16 %v1061, %v1060
        %v1071 = vpack.c.b16 %v1063, %v1062
        %1080 = vmatprep.subr.bf16.mxu0 0
        %1081 = vmatpush1.bf16.msra.mxu0 %v1064
        %1082 = vmatprep.subr.bf16.mxu0 0
        %1083 = vmatpush1.bf16.msra.mxu0 %v1065
        %1084 = vmatprep.subr.bf16.mxu0 0
        %1085 = vmatpush1.bf16.msra.mxu0 %v1066
        %1086 = vmatprep.subr.bf16.mxu0 0
        %1087 = vmatpush1.bf16.msra.mxu0 %v1067
        %1088 = vmatprep.subr.bf16.mxu0 0
        %1089 = vmatpush1.bf16.msra.mxu0 %v1068
        %1090 = vmatprep.subr.bf16.mxu0 0
        %1091 = vmatpush1.bf16.msra.mxu0 %v1069
        %1092 = vmatprep.subr.bf16.mxu0 0
        %1093 = vmatpush1.bf16.msra.mxu0 %v1070
        %1094 = vmatprep.subr.bf16.mxu0 0
        %1095 = vmatpush1.bf16.msra.mxu0 %v1071
        %1096 = vmatprep.subr.bf16.mxu0 0
        %1097 = vmatpush1.bf16.msra.mxu0 0
        %1098 = vmatprep.subr.bf16.mxu0 0
        %1099 = vmatpush1.bf16.msra.mxu0 0
        %1100 = vmatprep.subr.bf16.mxu0 0
        %1101 = vmatpush1.bf16.msra.mxu0 0
        %1102 = vmatprep.subr.bf16.mxu0 0
        %1103 = vmatpush1.bf16.msra.mxu0 0
        %1104 = vmatprep.subr.bf16.mxu0 0
        %1105 = vmatpush1.bf16.msra.mxu0 0
        %1106 = vmatprep.subr.bf16.mxu0 0
        %1107 = vmatpush1.bf16.msra.mxu0 0
        %1108 = vmatprep.subr.bf16.mxu0 0
        %1109 = vmatpush1.bf16.msra.mxu0 0
        %1110 = vmatprep.subr.bf16.mxu0 0
        %1111 = vmatpush1.bf16.msra.mxu0 0
        %1112 = vmatprep.mubr.bf16.mxu0 0
        %1113 = vmatmul.mubr.bf16.gmra.mrb[0].mxu0 %v998
        %v1114 = vpop.f32.mrb[0].mxu0
        %v1115 = vadd.f32 %v1030, %v1114
        %v1116 = vpop.f32.mrb[0].mxu0
        %v1117 = vpop.f32.mrb[0].mxu0
        %v1118 = vadd.f32 %v1030, %v1117
        %v1119 = vpop.f32.mrb[0].mxu0
        %1120 = vmatprep.mubr.bf16.mxu0 0
        %1121 = vmatmul.mubr.bf16.gmra.mrb[0].mxu0 %v999
        %v1122 = vpop.f32.mrb[0].mxu0
        %v1123 = vadd.f32 %v1030, %v1122
        %v1124 = vpop.f32.mrb[0].mxu0
        %v1125 = vpop.f32.mrb[0].mxu0
        %v1126 = vadd.f32 %v1030, %v1125
        %v1127 = vpop.f32.mrb[0].mxu0
        %1128 = vmatprep.mubr.bf16.mxu0 0
        %1129 = vmatmul.mubr.bf16.gmra.mrb[0].mxu0 %v1000
        %v1130 = vpop.f32.mrb[0].mxu0
        %v1131 = vadd.f32 %v1030, %v1130
        %v1132 = vpop.f32.mrb[0].mxu0
        %v1133 = vpop.f32.mrb[0].mxu0
        %v1134 = vadd.f32 %v1030, %v1133
        %v1135 = vpop.f32.mrb[0].mxu0
        %1136 = vmatprep.mubr.bf16.mxu0 0
        %1137 = vmatmul.mubr.bf16.gmra.mrb[0].mxu0 %v1001
        %v1138 = vpop.f32.mrb[0].mxu0
        %v1139 = vadd.f32 %v1030, %v1138
        %v1140 = vpop.f32.mrb[0].mxu0
        %v1141 = vpop.f32.mrb[0].mxu0
        %v1142 = vadd.f32 %v1030, %v1141
        %v1143 = vpop.f32.mrb[0].mxu0
        %1144 = vmatprep.mubr.bf16.mxu0 0
        %1145 = vmatmul.mubr.bf16.gmra.mrb[0].mxu0 %v1002
        %v1146 = vpop.f32.mrb[0].mxu0
        %v1147 = vadd.f32 %v1030, %v1146
        %v1148 = vpop.f32.mrb[0].mxu0
        %v1149 = vpop.f32.mrb[0].mxu0
        %v1150 = vadd.f32 %v1030, %v1149
        %v1151 = vpop.f32.mrb[0].mxu0
        %1152 = vmatprep.mubr.bf16.mxu0 0
        %1153 = vmatmul.mubr.bf16.gmra.mrb[0].mxu0 %v1003
        %v1154 = vpop.f32.mrb[0].mxu0
        %v1155 = vadd.f32 %v1030, %v1154
        %v1156 = vpop.f32.mrb[0].mxu0
        %v1157 = vpop.f32.mrb[0].mxu0
        %v1158 = vadd.f32 %v1030, %v1157
        %v1159 = vpop.f32.mrb[0].mxu0
        %1160 = vmatprep.mubr.bf16.mxu0 0
        %1161 = vmatmul.mubr.bf16.gmra.mrb[0].mxu0 %v1004
        %v1162 = vpop.f32.mrb[0].mxu0
        %v1163 = vadd.f32 %v1030, %v1162
        %v1164 = vpop.f32.mrb[0].mxu0
        %v1165 = vpop.f32.mrb[0].mxu0
        %v1166 = vadd.f32 %v1030, %v1165
        %v1167 = vpop.f32.mrb[0].mxu0
        %1168 = vmatprep.mubr.bf16.mxu0 0
        %1169 = vmatmul.mubr.bf16.gmra.mrb[0].mxu0 %v1005
        %v1170 = vpop.f32.mrb[0].mxu0
        %v1171 = vadd.f32 %v1030, %v1170
        %v1172 = vpop.f32.mrb[0].mxu0
        %v1173 = vpop.f32.mrb[0].mxu0
        %v1174 = vadd.f32 %v1030, %v1173
        %v1175 = vpop.f32.mrb[0].mxu0
        %1176 = vmatprep.mubr.bf16.mxu0 0
        %1177 = vmatmul.mubr.bf16.gmra.mrb[0].mxu0 %v1006
        %v1178 = vpop.f32.mrb[0].mxu0
        %v1179 = vadd.f32 %v1030, %v1178
        %v1180 = vpop.f32.mrb[0].mxu0
        %v1181 = vpop.f32.mrb[0].mxu0
        %v1182 = vpop.f32.mrb[0].mxu0
        %1183 = vdwg.mxu0
        %v1184 = vtanh.pop %v1115
        %v1185 = vtanh.pop %v1118
        %v1186 = vtanh.pop %v1123
        %v1187 = vtanh.pop %v1126
        %v1188 = vtanh.pop %v1131
        %v1189 = vtanh.pop %v1134
        %v1190 = vtanh.pop %v1139
        %v1191 = vtanh.pop %v1142
        %v1192 = vtanh.pop %v1147
        %v1193 = vtanh.pop %v1150
        %v1194 = vtanh.pop %v1155
        %v1195 = vtanh.pop %v1158
        %v1196 = vtanh.pop %v1163
        %v1197 = vtanh.pop %v1166
        %v1198 = vtanh.pop %v1171
        %v1199 = vtanh.pop %v1174
        %v1200 = vtanh.pop %v1179
        %v1201 = vpack.c.bf16 %v1185, %v1184
        %v1202 = vpack.c.bf16 %v1187, %v1186
        %v1203 = vpack.c.bf16 %v1189, %v1188
        %v1204 = vpack.c.bf16 %v1191, %v1190
        %v1205 = vpack.c.bf16 %v1193, %v1192
        %v1206 = vpack.c.bf16 %v1195, %v1194
        %v1207 = vpack.c.bf16 %v1197, %v1196
        %v1208 = vpack.c.bf16 %v1199, %v1198
        %v1209 = vpack.c.bf16 %v1200, %v1200
        %s1210 = scalar_lea.vmem [#allocation2], 320
        %v1211 = vld [vmem:[%s1210] sm:$0xf]
        %v1212 = vld [vmem:[%s1210 + $0x4] sm:$0xf]
        %v1213 = vld [vmem:[%s1210 + $0x8] sm:$0xf]
        %v1214 = vld [vmem:[%s1210 + $0xc] sm:$0xf]
        %v1215 = vld [vmem:[%s1210 + $0x10] sm:$0xf]
        %v1216 = vld [vmem:[%s1210 + $0x14] sm:$0xf]
        %v1217 = vld [vmem:[%s1210 + $0x18] sm:$0xf]
        %v1218 = vld [vmem:[%s1210 + $0x1c] sm:$0xf]
        %v1219 = vld [vmem:[%s1210 + $0x20] sm:$0xf]
        %v1220 = vld [vmem:[%s1210 + $0x24] sm:$0xf]
        %v1221 = vld [vmem:[%s1210 + $0x28] sm:$0xf]
        %v1222 = vld [vmem:[%s1210 + $0x2c] sm:$0xf]
        %v1223 = vld [vmem:[%s1210 + $0x30] sm:$0xf]
        %v1224 = vld [vmem:[%s1210 + $0x34] sm:$0xf]
        %v1225 = vld [vmem:[%s1210 + $0x38] sm:$0xf]
        %v1226 = vld [vmem:[%s1210 + $0x3c] sm:$0xf]
        %s1227 = scalar_lea.vmem %s2, 5
        %v1228 = vld [vmem:[%s1227] sm:$0x1]
        %v1230 = vlaneseq
        %v1231 = vshrl.u32 %v1230, 7
        %v1232 = vsub.s32 0, %v1231
        %v1233 = vrot.slane %v1228, %v1232
        %v1251 = vunpack.c.l.b16 %v1211
        %v1252 = vunpack.c.l.b16 %v1212
        %v1253 = vunpack.c.l.b16 %v1213
        %v1254 = vunpack.c.l.b16 %v1214
        %v1255 = vunpack.c.l.b16 %v1215
        %v1256 = vunpack.c.l.b16 %v1216
        %v1257 = vunpack.c.l.b16 %v1217
        %v1258 = vunpack.c.l.b16 %v1218
        %v1259 = vunpack.c.l.b16 %v1219
        %v1260 = vunpack.c.l.b16 %v1220
        %v1261 = vunpack.c.l.b16 %v1221
        %v1262 = vunpack.c.l.b16 %v1222
        %v1263 = vunpack.c.l.b16 %v1223
        %v1264 = vunpack.c.l.b16 %v1224
        %v1265 = vunpack.c.l.b16 %v1225
        %v1266 = vunpack.c.l.b16 %v1226
        %v1267 = vpack.c.b16 %v1252, %v1251
        %v1268 = vpack.c.b16 %v1254, %v1253
        %v1269 = vpack.c.b16 %v1256, %v1255
        %v1270 = vpack.c.b16 %v1258, %v1257
        %v1271 = vpack.c.b16 %v1260, %v1259
        %v1272 = vpack.c.b16 %v1262, %v1261
        %v1273 = vpack.c.b16 %v1264, %v1263
        %v1274 = vpack.c.b16 %v1266, %v1265
        %1283 = vmatprep.subr.bf16.mxu0 0
        %1284 = vmatpush1.bf16.msra.mxu0 %v1267
        %1285 = vmatprep.subr.bf16.mxu0 0
        %1286 = vmatpush1.bf16.msra.mxu0 %v1268
        %1287 = vmatprep.subr.bf16.mxu0 0
        %1288 = vmatpush1.bf16.msra.mxu0 %v1269
        %1289 = vmatprep.subr.bf16.mxu0 0
        %1290 = vmatpush1.bf16.msra.mxu0 %v1270
        %1291 = vmatprep.subr.bf16.mxu0 0
        %1292 = vmatpush1.bf16.msra.mxu0 %v1271
        %1293 = vmatprep.subr.bf16.mxu0 0
        %1294 = vmatpush1.bf16.msra.mxu0 %v1272
        %1295 = vmatprep.subr.bf16.mxu0 0
        %1296 = vmatpush1.bf16.msra.mxu0 %v1273
        %1297 = vmatprep.subr.bf16.mxu0 0
        %1298 = vmatpush1.bf16.msra.mxu0 %v1274
        %1299 = vmatprep.subr.bf16.mxu0 0
        %1300 = vmatpush1.bf16.msra.mxu0 0
        %1301 = vmatprep.subr.bf16.mxu0 0
        %1302 = vmatpush1.bf16.msra.mxu0 0
        %1303 = vmatprep.subr.bf16.mxu0 0
        %1304 = vmatpush1.bf16.msra.mxu0 0
        %1305 = vmatprep.subr.bf16.mxu0 0
        %1306 = vmatpush1.bf16.msra.mxu0 0
        %1307 = vmatprep.subr.bf16.mxu0 0
        %1308 = vmatpush1.bf16.msra.mxu0 0
        %1309 = vmatprep.subr.bf16.mxu0 0
        %1310 = vmatpush1.bf16.msra.mxu0 0
        %1311 = vmatprep.subr.bf16.mxu0 0
        %1312 = vmatpush1.bf16.msra.mxu0 0
        %1313 = vmatprep.subr.bf16.mxu0 0
        %1314 = vmatpush1.bf16.msra.mxu0 0
        %1315 = vmatprep.mubr.bf16.mxu0 0
        %1316 = vmatmul.mubr.bf16.gmra.mrb[0].mxu0 %v1201
        %v1317 = vpop.f32.mrb[0].mxu0
        %v1318 = vadd.f32 %v1233, %v1317
        %v1319 = vpop.f32.mrb[0].mxu0
        %v1320 = vpop.f32.mrb[0].mxu0
        %v1321 = vadd.f32 %v1233, %v1320
        %v1322 = vpop.f32.mrb[0].mxu0
        %1323 = vmatprep.mubr.bf16.mxu0 0
        %1324 = vmatmul.mubr.bf16.gmra.mrb[0].mxu0 %v1202
        %v1325 = vpop.f32.mrb[0].mxu0
        %v1326 = vadd.f32 %v1233, %v1325
        %v1327 = vpop.f32.mrb[0].mxu0
        %v1328 = vpop.f32.mrb[0].mxu0
        %v1329 = vadd.f32 %v1233, %v1328
        %v1330 = vpop.f32.mrb[0].mxu0
        %1331 = vmatprep.mubr.bf16.mxu0 0
        %1332 = vmatmul.mubr.bf16.gmra.mrb[0].mxu0 %v1203
        %v1333 = vpop.f32.mrb[0].mxu0
        %v1334 = vadd.f32 %v1233, %v1333
        %v1335 = vpop.f32.mrb[0].mxu0
        %v1336 = vpop.f32.mrb[0].mxu0
        %v1337 = vadd.f32 %v1233, %v1336
        %v1338 = vpop.f32.mrb[0].mxu0
        %1339 = vmatprep.mubr.bf16.mxu0 0
        %1340 = vmatmul.mubr.bf16.gmra.mrb[0].mxu0 %v1204
        %v1341 = vpop.f32.mrb[0].mxu0
        %v1342 = vadd.f32 %v1233, %v1341
        %v1343 = vpop.f32.mrb[0].mxu0
        %v1344 = vpop.f32.mrb[0].mxu0
        %v1345 = vadd.f32 %v1233, %v1344
        %v1346 = vpop.f32.mrb[0].mxu0
        %1347 = vmatprep.mubr.bf16.mxu0 0
        %1348 = vmatmul.mubr.bf16.gmra.mrb[0].mxu0 %v1205
        %v1349 = vpop.f32.mrb[0].mxu0
        %v1350 = vadd.f32 %v1233, %v1349
        %v1351 = vpop.f32.mrb[0].mxu0
        %v1352 = vpop.f32.mrb[0].mxu0
        %v1353 = vadd.f32 %v1233, %v1352
        %v1354 = vpop.f32.mrb[0].mxu0
        %1355 = vmatprep.mubr.bf16.mxu0 0
        %1356 = vmatmul.mubr.bf16.gmra.mrb[0].mxu0 %v1206
        %v1357 = vpop.f32.mrb[0].mxu0
        %v1358 = vadd.f32 %v1233, %v1357
        %v1359 = vpop.f32.mrb[0].mxu0
        %v1360 = vpop.f32.mrb[0].mxu0
        %v1361 = vadd.f32 %v1233, %v1360
        %v1362 = vpop.f32.mrb[0].mxu0
        %1363 = vmatprep.mubr.bf16.mxu0 0
        %1364 = vmatmul.mubr.bf16.gmra.mrb[0].mxu0 %v1207
        %v1365 = vpop.f32.mrb[0].mxu0
        %v1366 = vadd.f32 %v1233, %v1365
        %v1367 = vpop.f32.mrb[0].mxu0
        %v1368 = vpop.f32.mrb[0].mxu0
        %v1369 = vadd.f32 %v1233, %v1368
        %v1370 = vpop.f32.mrb[0].mxu0
        %1371 = vmatprep.mubr.bf16.mxu0 0
        %1372 = vmatmul.mubr.bf16.gmra.mrb[0].mxu0 %v1208
        %v1373 = vpop.f32.mrb[0].mxu0
        %v1374 = vadd.f32 %v1233, %v1373
        %v1375 = vpop.f32.mrb[0].mxu0
        %v1376 = vpop.f32.mrb[0].mxu0
        %v1377 = vadd.f32 %v1233, %v1376
        %v1378 = vpop.f32.mrb[0].mxu0
        %1379 = vmatprep.mubr.bf16.mxu0 0
        %1380 = vmatmul.mubr.bf16.gmra.mrb[0].mxu0 %v1209
        %v1381 = vpop.f32.mrb[0].mxu0
        %v1382 = vadd.f32 %v1233, %v1381
        %v1383 = vpop.f32.mrb[0].mxu0
        %v1384 = vpop.f32.mrb[0].mxu0
        %v1385 = vpop.f32.mrb[0].mxu0
        %1386 = vdwg.mxu0
        %vm1387 = vcmask 64512
        %1388 = vst.msk [vmem:[%s187] sm:$0xff] %vm1387, %v1318
        %1389 = vst.msk [vmem:[%s187 + $0x8] sm:$0xff] %vm1387, %v1321
        %1390 = vst.msk [vmem:[%s187 + $0x10] sm:$0xff] %vm1387, %v1326
        %1391 = vst.msk [vmem:[%s187 + $0x18] sm:$0xff] %vm1387, %v1329
        %1392 = vst.msk [vmem:[%s187 + $0x20] sm:$0xff] %vm1387, %v1334
        %1393 = vst.msk [vmem:[%s187 + $0x28] sm:$0xff] %vm1387, %v1337
        %1394 = vst.msk [vmem:[%s187 + $0x30] sm:$0xff] %vm1387, %v1342
        %1395 = vst.msk [vmem:[%s187 + $0x38] sm:$0xff] %vm1387, %v1345
        %1396 = vst.msk [vmem:[%s187 + $0x40] sm:$0xff] %vm1387, %v1350
        %1397 = vst.msk [vmem:[%s187 + $0x48] sm:$0xff] %vm1387, %v1353
        %1398 = vst.msk [vmem:[%s187 + $0x50] sm:$0xff] %vm1387, %v1358
        %1399 = vst.msk [vmem:[%s187 + $0x58] sm:$0xff] %vm1387, %v1361
        %1400 = vst.msk [vmem:[%s187 + $0x60] sm:$0xff] %vm1387, %v1366
        %1401 = vst.msk [vmem:[%s187 + $0x68] sm:$0xff] %vm1387, %v1369
        %1402 = vst.msk [vmem:[%s187 + $0x70] sm:$0xff] %vm1387, %v1374
        %1403 = vst.msk [vmem:[%s187 + $0x78] sm:$0xff] %vm1387, %v1377
        %1404 = vst.msk [vmem:[%s187 + $0x80] sm:$0xff] %vm1387, %v1382
        %s1405 = sand.u32 %s91, 1
        %s1406 = sand.u32 %s91, 1
        %s1407 = smul.addr %s1406, 136
        %s1408 = scalar_lea.vmem [#allocation4], %s1407
        // Predicated region
        $region37: #{tpu_custom_call.1} parent=31 // pred_check
          %p1409 = pneg %p101
        $region38: #{tpu_custom_call.1} parent=31 // pred_check_branch
          %1411 = sbr.rel (%p1409) target = $region40
        $region39: #{tpu_custom_call.1} parent=31 // pred_region
          %s1412 = smul.u32 17, %s15
          %s1413 = ssub.s32 33, %s1412
          %p1414 = scmp.lt.s32.totalorder %s1413, 17
          %s1415 = scalar_select %p1414, %s1413, 17
          %s1416 = smul.u32 128, %s1415
          %p1417 = scmp.ne.s32.totalorder 0, %s1416
          %s1418 = smul.addr %s1412, 8
          %s1419 = scalar_lea.vmem %s3, %s1418
          // Predicated region
          $region41: #{tpu_custom_call.1} parent=39 // pred_check
            %p1420 = pneg %p1417
          $region42: #{tpu_custom_call.1} parent=39 // pred_check_branch
            %1422 = sbr.rel (%p1420) target = $region44
          $region43: #{tpu_custom_call.1} parent=39 // pred_region
            // Predicated region
            $region45: #{tpu_custom_call.1} parent=43 // pred_check
              _
            $region46: #{tpu_custom_call.1} parent=43 // pred_check_branch
              %1424 = sbr.rel (0) target = $region48
            $region47: #{tpu_custom_call.1} parent=43 // pred_region
              // Predicated region
              $region67: #{tpu_custom_call.1} parent=47 // pred_check
                _
              $region68: #{tpu_custom_call.1} parent=47 // pred_check_branch
                %1506 = sbr.rel (0) target = $region70
              $region69: #{tpu_custom_call.1} parent=47 // pred_region
                %s1507 = sdiv.u32.pop %s1415, 17
                %s1508 = srem.u32.pop %s1415, 17
                // While loop
                $region71: #{tpu_custom_call.1} parent=69 // loop_pre_header
                  _
                $region72: #{tpu_custom_call.1} parent=69 // loop_header
                  %s1510 = sphi 0, %s1512
                  %p1511 = scmp.ge.s32.totalorder %s1510, %s1507
                  %s1515 = sphi 0, %s1554
                  %s1516 = sphi %s1408, %s1557
                  %s1517 = sphi %s1419, %s1558
                $region73: #{tpu_custom_call.1} parent=69 // loop_header_branch
                  %1514 = sbr.rel (%p1511) target = $region77
                $region74: #{tpu_custom_call.1} parent=69 // loop_body
                  %v1518 = vld [vmem:[%s1516] sm:$0xff]
                  %1519 = vst [vmem:[%s1517] sm:$0xff] %v1518
                  %v1520 = vld [vmem:[%s1516 + $0x8] sm:$0xff]
                  %1521 = vst [vmem:[%s1517 + $0x8] sm:$0xff] %v1520
                  %v1522 = vld [vmem:[%s1516 + $0x10] sm:$0xff]
                  %1523 = vst [vmem:[%s1517 + $0x10] sm:$0xff] %v1522
                  %v1524 = vld [vmem:[%s1516 + $0x18] sm:$0xff]
                  %1525 = vst [vmem:[%s1517 + $0x18] sm:$0xff] %v1524
                  %v1526 = vld [vmem:[%s1516 + $0x20] sm:$0xff]
                  %1527 = vst [vmem:[%s1517 + $0x20] sm:$0xff] %v1526
                  %v1528 = vld [vmem:[%s1516 + $0x28] sm:$0xff]
                  %1529 = vst [vmem:[%s1517 + $0x28] sm:$0xff] %v1528
                  %v1530 = vld [vmem:[%s1516 + $0x30] sm:$0xff]
                  %1531 = vst [vmem:[%s1517 + $0x30] sm:$0xff] %v1530
                  %v1532 = vld [vmem:[%s1516 + $0x38] sm:$0xff]
                  %1533 = vst [vmem:[%s1517 + $0x38] sm:$0xff] %v1532
                  %v1534 = vld [vmem:[%s1516 + $0x40] sm:$0xff]
                  %1535 = vst [vmem:[%s1517 + $0x40] sm:$0xff] %v1534
                  %v1536 = vld [vmem:[%s1516 + $0x48] sm:$0xff]
                  %1537 = vst [vmem:[%s1517 + $0x48] sm:$0xff] %v1536
                  %v1538 = vld [vmem:[%s1516 + $0x50] sm:$0xff]
                  %1539 = vst [vmem:[%s1517 + $0x50] sm:$0xff] %v1538
                  %v1540 = vld [vmem:[%s1516 + $0x58] sm:$0xff]
                  %1541 = vst [vmem:[%s1517 + $0x58] sm:$0xff] %v1540
                  %v1542 = vld [vmem:[%s1516 + $0x60] sm:$0xff]
                  %1543 = vst [vmem:[%s1517 + $0x60] sm:$0xff] %v1542
                  %v1544 = vld [vmem:[%s1516 + $0x68] sm:$0xff]
                  %1545 = vst [vmem:[%s1517 + $0x68] sm:$0xff] %v1544
                  %v1546 = vld [vmem:[%s1516 + $0x70] sm:$0xff]
                  %1547 = vst [vmem:[%s1517 + $0x70] sm:$0xff] %v1546
                  %v1548 = vld [vmem:[%s1516 + $0x78] sm:$0xff]
                  %1549 = vst [vmem:[%s1517 + $0x78] sm:$0xff] %v1548
                  %v1550 = vld [vmem:[%s1516 + $0x80] sm:$0xff]
                  %1551 = vst [vmem:[%s1517 + $0x80] sm:$0xff] %v1550
                  %s1552 = sadd.s32 1, %s1515
                  %p1553 = scmp.ge.s32.totalorder %s1552, %s1507
                  %s1554 = scalar_select %p1553, 0, %s1552
                  %s1555 = smul.u32 %s1554, 136
                  %s1556 = smul.u32 %s1554, 136
                  %s1557 = scalar_lea.vmem %s1408, %s1555 [#allocation4]
                  %s1558 = scalar_lea.vmem %s1419, %s1556
                $region75: #{tpu_custom_call.1} parent=69 // loop_footer
                  %s1512 = sadd.s32 %s1510, 1
                $region76: #{tpu_custom_call.1} parent=69 // loop_footer_branch
                  %1509 = sbr.rel target = $region72
                $region77: #{tpu_custom_call.1} parent=69 // loop_exit
                  _
                %s1559 = sdiv.u32.pop %s1415, 17
                %s1560 = srem.u32.pop %s1415, 17
                %s1561 = smul.u32 %s1559, 17
                %s1562 = smul.u32 8, %s1561
                %s1563 = scalar_lea.vmem %s1408, %s1562 [#allocation4]
                %s1564 = smul.u32 8, %s1561
                %s1565 = scalar_lea.vmem %s1419, %s1564
                // While loop
                $region78: #{tpu_custom_call.1} parent=69 // loop_pre_header
                  _
                $region79: #{tpu_custom_call.1} parent=69 // loop_header
                  %s1567 = sphi 0, %s1569
                  %p1568 = scmp.ge.s32.totalorder %s1567, %s1560
                  %s1572 = sphi 0, %s1579
                  %s1573 = sphi %s1563, %s1582
                  %s1574 = sphi %s1565, %s1583
                $region80: #{tpu_custom_call.1} parent=69 // loop_header_branch
                  %1571 = sbr.rel (%p1568) target = $region84
                $region81: #{tpu_custom_call.1} parent=69 // loop_body
                  %v1575 = vld [vmem:[%s1573] sm:$0xff]
                  %1576 = vst [vmem:[%s1574] sm:$0xff] %v1575
                  %s1577 = sadd.s32 1, %s1572
                  %p1578 = scmp.ge.s32.totalorder %s1577, %s1560
                  %s1579 = scalar_select %p1578, 0, %s1577
                  %s1580 = smul.u32 %s1579, 8
                  %s1581 = smul.u32 %s1579, 8
                  %s1582 = scalar_lea.vmem %s1563, %s1580 [#allocation4]
                  %s1583 = scalar_lea.vmem %s1565, %s1581
                $region82: #{tpu_custom_call.1} parent=69 // loop_footer
                  %s1569 = sadd.s32 %s1567, 1
                $region83: #{tpu_custom_call.1} parent=69 // loop_footer_branch
                  %1566 = sbr.rel target = $region79
                $region84: #{tpu_custom_call.1} parent=69 // loop_exit
                  _
              $region70: #{tpu_custom_call.1} parent=47 // pred_fallthru
                _
              // Predicated region
              $region85: #{tpu_custom_call.1} parent=47 // pred_check
                _
              $region86: #{tpu_custom_call.1} parent=47 // pred_check_branch
                %1585 = sbr.rel target = $region88
              $region87: #{tpu_custom_call.1} parent=47 // pred_region
                _
              $region88: #{tpu_custom_call.1} parent=47 // pred_fallthru
                _
            $region48: #{tpu_custom_call.1} parent=43 // pred_fallthru
              _
            // Predicated region
            $region49: #{tpu_custom_call.1} parent=43 // pred_check
              _
            $region50: #{tpu_custom_call.1} parent=43 // pred_check_branch
              %1426 = sbr.rel target = $region52
            $region51: #{tpu_custom_call.1} parent=43 // pred_region
              %s1428 = sdiv.u32.pop %s1415, 17
              %s1429 = srem.u32.pop %s1415, 17
              // While loop
              $region53: #{tpu_custom_call.1} parent=51 // loop_pre_header
                _
              $region54: #{tpu_custom_call.1} parent=51 // loop_header
                %s1431 = sphi 0, %s1433
                %p1432 = scmp.ge.s32.totalorder %s1431, %s1428
                %s1436 = sphi 0, %s1475
                %s1437 = sphi %s1408, %s1478
                %s1438 = sphi %s1419, %s1479
              $region55: #{tpu_custom_call.1} parent=51 // loop_header_branch
                %1435 = sbr.rel (%p1432) target = $region59
              $region56: #{tpu_custom_call.1} parent=51 // loop_body
                %v1439 = vld [vmem:[%s1437] sm:$0xff]
                %1440 = vst [vmem:[%s1438] sm:$0xff] %v1439
                %v1441 = vld [vmem:[%s1437 + $0x8] sm:$0xff]
                %1442 = vst [vmem:[%s1438 + $0x8] sm:$0xff] %v1441
                %v1443 = vld [vmem:[%s1437 + $0x10] sm:$0xff]
                %1444 = vst [vmem:[%s1438 + $0x10] sm:$0xff] %v1443
                %v1445 = vld [vmem:[%s1437 + $0x18] sm:$0xff]
                %1446 = vst [vmem:[%s1438 + $0x18] sm:$0xff] %v1445
                %v1447 = vld [vmem:[%s1437 + $0x20] sm:$0xff]
                %1448 = vst [vmem:[%s1438 + $0x20] sm:$0xff] %v1447
                %v1449 = vld [vmem:[%s1437 + $0x28] sm:$0xff]
                %1450 = vst [vmem:[%s1438 + $0x28] sm:$0xff] %v1449
                %v1451 = vld [vmem:[%s1437 + $0x30] sm:$0xff]
                %1452 = vst [vmem:[%s1438 + $0x30] sm:$0xff] %v1451
                %v1453 = vld [vmem:[%s1437 + $0x38] sm:$0xff]
                %1454 = vst [vmem:[%s1438 + $0x38] sm:$0xff] %v1453
                %v1455 = vld [vmem:[%s1437 + $0x40] sm:$0xff]
                %1456 = vst [vmem:[%s1438 + $0x40] sm:$0xff] %v1455
                %v1457 = vld [vmem:[%s1437 + $0x48] sm:$0xff]
                %1458 = vst [vmem:[%s1438 + $0x48] sm:$0xff] %v1457
                %v1459 = vld [vmem:[%s1437 + $0x50] sm:$0xff]
                %1460 = vst [vmem:[%s1438 + $0x50] sm:$0xff] %v1459
                %v1461 = vld [vmem:[%s1437 + $0x58] sm:$0xff]
                %1462 = vst [vmem:[%s1438 + $0x58] sm:$0xff] %v1461
                %v1463 = vld [vmem:[%s1437 + $0x60] sm:$0xff]
                %1464 = vst [vmem:[%s1438 + $0x60] sm:$0xff] %v1463
                %v1465 = vld [vmem:[%s1437 + $0x68] sm:$0xff]
                %1466 = vst [vmem:[%s1438 + $0x68] sm:$0xff] %v1465
                %v1467 = vld [vmem:[%s1437 + $0x70] sm:$0xff]
                %1468 = vst [vmem:[%s1438 + $0x70] sm:$0xff] %v1467
                %v1469 = vld [vmem:[%s1437 + $0x78] sm:$0xff]
                %1470 = vst [vmem:[%s1438 + $0x78] sm:$0xff] %v1469
                %v1471 = vld [vmem:[%s1437 + $0x80] sm:$0xff]
                %1472 = vst [vmem:[%s1438 + $0x80] sm:$0xff] %v1471
                %s1473 = sadd.s32 1, %s1436
                %p1474 = scmp.ge.s32.totalorder %s1473, %s1428
                %s1475 = scalar_select %p1474, 0, %s1473
                %s1476 = smul.u32 %s1475, 136
                %s1477 = smul.u32 %s1475, 136
                %s1478 = scalar_lea.vmem %s1408, %s1476 [#allocation4]
                %s1479 = scalar_lea.vmem %s1419, %s1477
              $region57: #{tpu_custom_call.1} parent=51 // loop_footer
                %s1433 = sadd.s32 %s1431, 1
              $region58: #{tpu_custom_call.1} parent=51 // loop_footer_branch
                %1430 = sbr.rel target = $region54
              $region59: #{tpu_custom_call.1} parent=51 // loop_exit
                _
              %s1480 = sdiv.u32.pop %s1415, 17
              %s1481 = srem.u32.pop %s1415, 17
              %s1482 = smul.u32 %s1480, 17
              %s1483 = smul.u32 8, %s1482
              %s1484 = scalar_lea.vmem %s1408, %s1483 [#allocation4]
              %s1485 = smul.u32 8, %s1482
              %s1486 = scalar_lea.vmem %s1419, %s1485
              // While loop
              $region60: #{tpu_custom_call.1} parent=51 // loop_pre_header
                _
              $region61: #{tpu_custom_call.1} parent=51 // loop_header
                %s1488 = sphi 0, %s1490
                %p1489 = scmp.ge.s32.totalorder %s1488, %s1481
                %s1493 = sphi 0, %s1500
                %s1494 = sphi %s1484, %s1503
                %s1495 = sphi %s1486, %s1504
              $region62: #{tpu_custom_call.1} parent=51 // loop_header_branch
                %1492 = sbr.rel (%p1489) target = $region66
              $region63: #{tpu_custom_call.1} parent=51 // loop_body
                %v1496 = vld [vmem:[%s1494] sm:$0xff]
                %1497 = vst [vmem:[%s1495] sm:$0xff] %v1496
                %s1498 = sadd.s32 1, %s1493
                %p1499 = scmp.ge.s32.totalorder %s1498, %s1481
                %s1500 = scalar_select %p1499, 0, %s1498
                %s1501 = smul.u32 %s1500, 8
                %s1502 = smul.u32 %s1500, 8
                %s1503 = scalar_lea.vmem %s1484, %s1501 [#allocation4]
                %s1504 = scalar_lea.vmem %s1486, %s1502
              $region64: #{tpu_custom_call.1} parent=51 // loop_footer
                %s1490 = sadd.s32 %s1488, 1
              $region65: #{tpu_custom_call.1} parent=51 // loop_footer_branch
                %1487 = sbr.rel target = $region61
              $region66: #{tpu_custom_call.1} parent=51 // loop_exit
                _
            $region52: #{tpu_custom_call.1} parent=43 // pred_fallthru
              _
          $region44: #{tpu_custom_call.1} parent=39 // pred_fallthru
            _
          %1586 = vnop
        $region40: #{tpu_custom_call.1} parent=31 // pred_fallthru
          _
      $region32: #{tpu_custom_call.1} parent=5 // pred_fallthru
        _
      %p1587 = scmp.le.s32.totalorder 2, %s10
      // Predicated region
      $region89: #{tpu_custom_call.1} parent=5 // pred_check
        %p1588 = pneg %p1587
      $region90: #{tpu_custom_call.1} parent=5 // pred_check_branch
        %1590 = sbr.rel (%p1588) target = $region92
      $region91: #{tpu_custom_call.1} parent=5 // pred_region
        %s1591 = ssub.s32 %s10, 2
        // Predicated region
        $region93: #{tpu_custom_call.1} parent=91 // pred_check
          %p1592 = pneg %p107
        $region94: #{tpu_custom_call.1} parent=91 // pred_check_branch
          %1594 = sbr.rel (%p1592) target = $region96
        $region95: #{tpu_custom_call.1} parent=91 // pred_region
          %s1595 = sand.u32 %s92, 1
          %s1596 = sand.u32 %s92, 1
          %s1597 = smul.addr %s1596, 136
          %s1598 = scalar_lea.vmem [#allocation4], %s1597
        $region96: #{tpu_custom_call.1} parent=91 // pred_fallthru
          _
      $region92: #{tpu_custom_call.1} parent=5 // pred_fallthru
        _
    $region6: #{tpu_custom_call.1} parent=1 // loop_footer
      %s14 = sadd.s32 1, %s10
    $region7: #{tpu_custom_call.1} parent=1 // loop_footer_branch
      %9 = sbr.rel target = $region3
    $region8: #{tpu_custom_call.1} parent=1 // loop_exit
      _
    %1599 = vsyncpa [#allocation3], 1
    %s1600 = scalar_lea.sflag [#allocation3], 1
    %1601 = vsyncpa %s1600, 1

</llo_original>
